<compile_context>
chip_gen: v6e
topology: v6e:2x2x1
jax: 0.10.0
libtpu: 0.0.40
codegen_flags: <defaults>
</compile_context>

<pallas_src>
import math
from functools import partial

import numpy as np
import jax
import jax.numpy as jnp
from jax.experimental import pallas as pl
from jax.experimental.pallas import tpu as pltpu


def _round_up(a, b):
    return (a + b - 1) // b * b


# ----------------------------------------------------------------------------
# Kernel 1: shared input_linear + masked layer-norm statistics (tiled rows)
# ----------------------------------------------------------------------------
def proj_kernel(xf_ref, xm_ref, yf_ref, ym_ref, w_ref, b_ref,
                xo_ref, yo_ref, sv_ref):
    f32 = jnp.float32
    t = pl.program_id(0)
    w = w_ref[...]                       # [F, C]  bf16
    b = b_ref[...]                       # [1, C]  f32

    @pl.when(t == 0)
    def _():
        # fragment branch is small: do it once, output block stays resident
        sv_ref[...] = jnp.zeros_like(sv_ref)
        yp = jnp.dot(yf_ref[...], w, preferred_element_type=f32) + b   # [Ry, C]
        yo_ref[...] = yp.astype(yo_ref.dtype)
        ym = yp * ym_ref[...]
        sv_ref[2:3, :] = jnp.sum(ym, axis=0, keepdims=True)
        sv_ref[3:4, :] = jnp.sum(ym * yp, axis=0, keepdims=True)

    # receptor (node) branch: one row tile per step, stats accumulated
    xp = jnp.dot(xf_ref[...], w, preferred_element_type=f32) + b       # [T, C]
    xo_ref[...] = xp.astype(xo_ref.dtype)
    xm = xp * xm_ref[...]
    sv_ref[0:1, :] = sv_ref[0:1, :] + jnp.sum(xm, axis=0, keepdims=True)
    sv_ref[1:2, :] = sv_ref[1:2, :] + jnp.sum(xm * xp, axis=0, keepdims=True)


def proj_and_stats(xfeat, xmask, yfeat, ymask, W_bf, b_row, tile_rows):
    Rx, F = xfeat.shape
    Ry = yfeat.shape[0]
    C = W_bf.shape[1]
    return pl.pallas_call(
        proj_kernel,
        out_shape=(jax.ShapeDtypeStruct((Rx, C), jnp.bfloat16),   # xs (unnormalized)
                   jax.ShapeDtypeStruct((Ry, C), jnp.bfloat16),   # ys (unnormalized)
                   jax.ShapeDtypeStruct((8, C), jnp.float32)),    # per-lane stats
        grid=(Rx // tile_rows,),
        in_specs=[
            pl.BlockSpec((tile_rows, F), lambda t: (t, 0)),
            pl.BlockSpec((tile_rows, 1), lambda t: (t, 0)),
            pl.BlockSpec((Ry, F), lambda t: (0, 0)),
            pl.BlockSpec((Ry, 1), lambda t: (0, 0)),
            pl.BlockSpec((F, C), lambda t: (0, 0)),
            pl.BlockSpec((1, C), lambda t: (0, 0)),
        ],
        out_specs=(
            pl.BlockSpec((tile_rows, C), lambda t: (t, 0)),
            pl.BlockSpec((Ry, C), lambda t: (0, 0)),
            pl.BlockSpec((8, C), lambda t: (0, 0)),
        ),
        compiler_params=pltpu.CompilerParams(
            dimension_semantics=("arbitrary",),      # stats accumulate across steps
            vmem_limit_bytes=32 * 1024 * 1024),
    )(xfeat, xmask, yfeat, ymask, W_bf, b_row)


# ----------------------------------------------------------------------------
# Kernel 2: gated cross-attention, G segments per grid step, node axis on lanes
# ----------------------------------------------------------------------------
def make_attn_kernel(n_layers, G, n_pad, M_pad, K, n_out):
    def kernel(scal_ref, x_ref, y_ref, amask_ref, ue_ref, v_ref, vt_ref,
               qm_ref, vg_ref, o_ref):
        f32 = jnp.float32
        bf16 = jnp.bfloat16

        # ---- hoisted constant loads ----------------------------------------
        scal = scal_ref[...]             # [1, 8]  (mu_x, rsig_x, mu_y, rsig_y, gb)
        mu_x, rsig_x = scal[0:1, 0:1], scal[0:1, 1:2]
        mu_y, rsig_y = scal[0:1, 2:3], scal[0:1, 3:4]
        gb = scal[0:1, 4:5]
        ue = ue_ref[...]                 # [C, K+1] bf16  == [U | Wg_x]
        vt = vt_ref[...]                 # [K, C]   bf16  == V^T
        vg = vg_ref[...]                 # [1, K]   f32   == V^T @ Wg_p
        amask = amask_ref[...]           # [G, 1, n_pad]  additive (-1e30 on pad)

        # ---- fragment side: y_p = relu(q * relu(y @ V)) --------------------
        y2 = (y_ref[...].astype(f32) - mu_y) * rsig_y              # [G*M_pad, C]
        y_p2 = jnp.maximum(
            jnp.dot(y2.astype(bf16), v_ref[...],
                    preferred_element_type=f32), 0.0)               # [G*M_pad, K]
        # qm zeroes phantom fragment rows so they never leak into sums over M
        y_p = jnp.maximum(y_p2.reshape(G, M_pad, K) * qm_ref[...], 0.0)
        y_p_bf = y_p.astype(bf16)                                   # [G, M_pad, K]

        # ---- receptor side: lazily layer-normalized x -----------------------
        x = (x_ref[...].astype(f32) - mu_x) * rsig_x                # [G*n_pad, C]

        x_p3 = None
        logits = None                                               # "I" in ref
        for il in range(n_layers):
            # x @ [U | Wg_x]  -> attention features + gate-x column in one matmul
            xu = jnp.dot(x.astype(bf16), ue, preferred_element_type=f32)
            x_p = jnp.maximum(xu[:, :K], 0.0)                       # [G*n_pad, K]
            x_p3 = x_p.reshape(G, n_pad, K)
            # logits with the node axis on lanes: [G, M_pad, n_pad]
            logits = jnp.einsum('gmk,gnk->gmn', y_p_bf, x_p3.astype(bf16),
                                preferred_element_type=f32)
            if il < n_layers - 1:
                # masked softmax over the node axis (== dim 0 in the reference)
                lm = logits + amask
                mx = jnp.max(lm, axis=-1, keepdims=True)
                e = jnp.exp(lm - mx)
                den = jnp.sum(e, axis=-1, keepdims=True)
                A = e * pl.reciprocal(den, approx=True)             # [G, M_pad, n_pad]
                s3 = jnp.maximum(
                    jnp.einsum('gmn,gmk->gnk', A.astype(bf16), y_p_bf,
                               preferred_element_type=f32), 0.0)    # [G, n_pad, K]
                s2 = s3.reshape(G * n_pad, K)
                xp2 = jnp.dot(s2.astype(bf16), vt,
                              preferred_element_type=f32)           # [G*n_pad, C]
                # gate: x-part from the extra matmul column, xp2-part as
                # VPU mul + lane reduce (no C->1 MXU matvec)
                z = xu[:, K:K + 1] + jnp.sum(s2 * vg, axis=-1, keepdims=True) + gb
                z = 1.0 / (1.0 + jnp.exp(-z))                       # [G*n_pad, 1]
                x = x + z * (xp2 - x)

        # final score: p = sigmoid(sum_k x_p * (I @ y_p))
        p_k = jnp.einsum('gmn,gmk->gnk', logits.astype(bf16), y_p_bf,
                         preferred_element_type=f32)                # [G, n_pad, K]
        p = jnp.sum(x_p3 * p_k, axis=-1)                            # [G, n_pad]
        p = 1.0 / (1.0 + jnp.exp(-p))
        if n_out > n_pad:                                           # lane-dense store
            p = jnp.concatenate([p, jnp.zeros((G, n_out - n_pad), f32)], axis=-1)
        o_ref[...] = p.reshape(G, 1, n_out)

    return kernel


def attention_scores(scal, xproj, yproj, amask, UE, Vb, Vt, qm, vg,
                     *, B_pad, G, n_pad, M_pad, C, K, n_out, n_layers):
    kernel = make_attn_kernel(n_layers, G, n_pad, M_pad, K, n_out)
    out = pl.pallas_call(
        kernel,
        out_shape=jax.ShapeDtypeStruct((B_pad, 1, n_out), jnp.float32),
        grid=(B_pad // G,),
        in_specs=[
            pl.BlockSpec((1, 8), lambda g: (0, 0)),                  # scalars
            pl.BlockSpec((G * n_pad, C), lambda g: (g, 0)),          # xs (bf16)
            pl.BlockSpec((G * M_pad, C), lambda g: (g, 0)),          # ys (bf16)
            pl.BlockSpec((G, 1, n_pad), lambda g: (g, 0, 0)),        # additive mask
            pl.BlockSpec((C, K + 1), lambda g: (0, 0)),              # [U | Wg_x]
            pl.BlockSpec((C, K), lambda g: (0, 0)),                  # V
            pl.BlockSpec((K, C), lambda g: (0, 0)),                  # V^T
            pl.BlockSpec((1, M_pad, K), lambda g: (0, 0, 0)),        # q (masked rows)
            pl.BlockSpec((1, K), lambda g: (0, 0)),                  # V^T @ Wg_p
        ],
        out_specs=pl.BlockSpec((G, 1, n_out), lambda g: (g, 0, 0)),
        compiler_params=pltpu.CompilerParams(
            dimension_semantics=("parallel",),       # segment groups across TCs on v7x
            vmem_limit_bytes=32 * 1024 * 1024),
    )(scal, xproj, yproj, amask, UE, Vb, Vt, qm, vg)
    return out[:, 0, :]                              # [B_pad, n_out]


# ----------------------------------------------------------------------------
# Forward (mirrors AttnModel.forward, inference mode), jitted end-to-end
# ----------------------------------------------------------------------------
@partial(jax.jit, static_argnums=(3, 4))
def forward(frag_emb, node_features, params, batch_num_nodes, n_attn_layers):
    B, M, F = frag_emb.shape
    N = node_features.shape[0]
    W, bW = params["W"], params["b"]
    U, V, q = params["U"], params["V"], params["q"]
    Wg_x, Wg_p, bg = params["Wg_x"], params["Wg_p"], params["bg"]
    C, K = W.shape[1], U.shape[1]

    max_n = max(batch_num_nodes)
    n_pad = _round_up(max_n, 8)                      # per-segment node slot
    M_pad = _round_up(M, 8)                          # fragment-residue slot
    n_out = _round_up(n_pad, 128)                    # lane-dense output width

    # segments per attention step: fill ~128 sublane rows, keep >=2 grid steps
    G = max(1, min(max(1, 128 // n_pad), max(1, (B + 1) // 2)))
    B_pad = _round_up(B, G)

    # ---- static padded-layout gather index & masks (batch_num_nodes static) --
    gather_idx = np.full((B_pad * n_pad,), N, dtype=np.int32)   # N -> zero row
    xmask_np = np.zeros((B_pad * n_pad, 1), dtype=np.float32)
    amask_np = np.full((B_pad, 1, n_pad), -1e30, dtype=np.float32)
    off = 0
    for bidx, n in enumerate(batch_num_nodes):
        gather_idx[bidx * n_pad: bidx * n_pad + n] = np.arange(off, off + n)
        xmask_np[bidx * n_pad: bidx * n_pad + n, 0] = 1.0
        amask_np[bidx, 0, :n] = 0.0
        off += n
    ymask_np = np.zeros((B_pad, M_pad, 1), dtype=np.float32)
    ymask_np[:B, :M, 0] = 1.0

    nf_ext = jnp.concatenate(
        [node_features.astype(jnp.float32), jnp.zeros((1, F), jnp.float32)], axis=0)
    xfeat = jnp.take(nf_ext, jnp.asarray(gather_idx), axis=0).astype(jnp.bfloat16)
    xmask = jnp.asarray(xmask_np)

    yfeat = jnp.zeros((B_pad, M_pad, F), jnp.float32)
    yfeat = yfeat.at[:B, :M, :].set(frag_emb.astype(jnp.float32))
    yfeat = yfeat.reshape(B_pad * M_pad, F).astype(jnp.bfloat16)
    ymask = jnp.asarray(ymask_np.reshape(B_pad * M_pad, 1))
    amask = jnp.asarray(amask_np)

    # ---- kernel 1: projection + layer-norm statistics ------------------------
    steps_total = B_pad // G
    tile_groups = 1                                   # production target: ~512 rows
    for cand in range(steps_total, 0, -1):
        rows = cand * G * n_pad
        if (steps_total % cand == 0 and rows <= 512
                and (steps_total // cand >= 2 or steps_total < 2)):
            tile_groups = cand
            break
    tile_rows = tile_groups * G * n_pad

    xproj, yproj, statsv = proj_and_stats(
        xfeat, xmask, yfeat, ymask,
        W.astype(jnp.bfloat16), bW.reshape(1, C).astype(jnp.float32), tile_rows)

    # finalize whole-tensor layer-norm stats (tiny, plain JAX)
    cnt_x = float(N * C)
    cnt_y = float(B * M * C)
    sum_x, ss_x = jnp.sum(statsv[0]), jnp.sum(statsv[1])
    sum_y, ss_y = jnp.sum(statsv[2]), jnp.sum(statsv[3])
    mu_x = sum_x / cnt_x
    var_x = jnp.maximum(ss_x / cnt_x - mu_x * mu_x, 0.0)
    rsig_x = jax.lax.rsqrt(var_x + 1e-5)
    mu_y = sum_y / cnt_y
    var_y = jnp.maximum(ss_y / cnt_y - mu_y * mu_y, 0.0)
    rsig_y = jax.lax.rsqrt(var_y + 1e-5)
    z0 = jnp.zeros((), jnp.float32)
    scal = jnp.stack([mu_x, rsig_x, mu_y, rsig_y, bg[0, 0],
                      z0, z0, z0]).reshape(1, 8).astype(jnp.float32)

    # ---- attention weights (gate matvecs folded into existing matmuls) -------
    UE = jnp.concatenate([U, Wg_x], axis=1).astype(jnp.bfloat16)     # [C, K+1]
    Vb = V.astype(jnp.bfloat16)                                      # [C, K]
    Vt = V.T.astype(jnp.bfloat16)                                    # [K, C]
    vg = (V.T @ Wg_p).reshape(1, K).astype(jnp.float32)              # [1, K]
    qm = jnp.zeros((1, M_pad, K), jnp.float32).at[0, :M, :].set(
        jnp.broadcast_to(q, (M, K)))                                 # phantom rows zero

    scores = attention_scores(
        scal, xproj, yproj, amask, UE, Vb, Vt, qm, vg,
        B_pad=B_pad, G=G, n_pad=n_pad, M_pad=M_pad, C=C, K=K,
        n_out=n_out, n_layers=n_attn_layers)

    return [scores[b, :n] for b, n in enumerate(batch_num_nodes)]


# ----------------------------------------------------------------------------
# Pure-JAX reference (mirrors the PyTorch forward) for correctness checking
# ----------------------------------------------------------------------------
def reference_forward(frag_emb, node_features, params, batch_num_nodes, n_attn_layers):
    W, bW = params["W"], params["b"]
    U, V, q = params["U"], params["V"], params["q"]
    Wg = jnp.concatenate([params["Wg_x"], params["Wg_p"]], axis=0)
    bg = params["bg"][0, 0]

    def whole_ln(t):
        mu = jnp.mean(t)
        var = jnp.mean((t - mu) ** 2)
        return (t - mu) / jnp.sqrt(var + 1e-5)

    xs = whole_ln(node_features @ W + bW)
    ys = whole_ln(frag_emb @ W + bW)

    ps = []
    off = 0
    for n, y in zip(batch_num_nodes, ys):
        y_p = jax.nn.relu(y @ V)
        y_p = jax.nn.relu(q[None, :] * y_p)
        x = xs[off:off + n]
        logits = None
        x_p = None
        for il in range(n_attn_layers):
            x_p = jax.nn.relu(x @ U)
            logits = x_p @ y_p.T
            if il < n_attn_layers - 1:
                A = jax.nn.softmax(logits, axis=0)
                xp2 = jax.nn.relu(A @ y_p)
                xp2 = xp2 @ V.T
                z = jax.nn.sigmoid(jnp.concatenate([x, xp2], axis=-1) @ Wg + bg)
                x = (1.0 - z) * x + z * xp2
        p = logits @ y_p
        p = jnp.sum(x_p * p, axis=1)
        ps.append(jax.nn.sigmoid(p))
        off += n
    return ps


# ----------------------------------------------------------------------------
# Parameter init (deterministic, in-script)
# ----------------------------------------------------------------------------
def init_params(key, num_node_feats, c_collapse, c_attn):
    ks = jax.random.split(key, 9)
    W = jax.random.normal(ks[0], (num_node_feats, c_collapse), jnp.float32) / math.sqrt(num_node_feats)
    b = jax.random.normal(ks[1], (c_collapse,), jnp.float32) * 0.01
    U = jax.random.uniform(ks[2], (c_collapse, c_attn), jnp.float32) / math.sqrt(c_collapse)
    V = jax.random.uniform(ks[3], (c_collapse, c_attn), jnp.float32) / math.sqrt(c_collapse)
    q = jax.random.uniform(ks[4], (c_attn,), jnp.float32)
    Wg = jax.random.normal(ks[5], (2 * c_collapse, 1), jnp.float32) / math.sqrt(2 * c_collapse)
    bg = jax.random.normal(ks[6], (1, 1), jnp.float32) * 0.01
    # final_linear exists in the module but is never used in forward().
    Wf = jax.random.normal(ks[7], (c_attn, 1), jnp.float32) / math.sqrt(c_attn)
    bf = jax.random.normal(ks[8], (1,), jnp.float32) * 0.01
    return {"W": W, "b": b, "U": U, "V": V, "q": q,
            "Wg_x": Wg[:c_collapse], "Wg_p": Wg[c_collapse:], "bg": bg,
            "W_final": Wf, "b_final": bf}


# ----------------------------------------------------------------------------
# Main
# ----------------------------------------------------------------------------
if __name__ == "__main__":
    num_node_feats = 56
    num_edge_feats = 8
    num_channels_collapse = 128
    num_channels_attn = 32
    n_attn_layers = 3
    batch_num_nodes = (8, 6)          # ragged segments (exercises masking path)
    B = len(batch_num_nodes)
    N = sum(batch_num_nodes)
    M = 6                             # fragment residues per fragment embedding

    key = jax.random.PRNGKey(0)
    k_nf, k_fe, k_ea, k_p = jax.random.split(key, 4)

    node_features = jax.random.normal(k_nf, (N, num_node_feats), jnp.float32)
    frag_emb = jax.random.normal(k_fe, (B, M, num_node_feats), jnp.float32)
    edge_features = jax.random.normal(k_ea, (20, num_edge_feats), jnp.float32)  # unused in forward

    params = init_params(k_p, num_node_feats, num_channels_collapse, num_channels_attn)

    ps = forward(frag_emb, node_features, params, batch_num_nodes, n_attn_layers)
    ps = [jax.block_until_ready(p) for p in ps]

    ps_ref = reference_forward(frag_emb, node_features, params, batch_num_nodes, n_attn_layers)
    for p, p_ref, n in zip(ps, ps_ref, batch_num_nodes):
        assert p.shape == (n,)
        assert bool(jnp.all(jnp.isfinite(p)))
        # bf16 matmul inputs + approx reciprocal -> slightly looser tolerance
        np.testing.assert_allclose(np.asarray(p), np.asarray(p_ref), rtol=4e-2, atol=4e-2)

    print("KERNEL_OK")
</pallas_src>

<mosaic_0001>
module attributes {stable_mosaic.version = 11 : i64} {
  func.func @proj_kernel(%arg0: i32, %arg1: memref<8x56xbf16, #tpu.memory_space<vmem>>, %arg2: memref<8x1xf32, #tpu.memory_space<vmem>>, %arg3: memref<16x56xbf16, #tpu.memory_space<vmem>>, %arg4: memref<16x1xf32, #tpu.memory_space<vmem>>, %arg5: memref<56x128xbf16, #tpu.memory_space<vmem>>, %arg6: memref<1x128xf32, #tpu.memory_space<vmem>>, %arg7: memref<8x128xbf16, #tpu.memory_space<vmem>>, %arg8: memref<16x128xbf16, #tpu.memory_space<vmem>>, %arg9: memref<8x128xf32, #tpu.memory_space<vmem>>) attributes {dimension_semantics = [#tpu.dimension_semantics<arbitrary>], iteration_bounds = array<i64: 2>, scalar_prefetch = 0 : i64, scratch_operands = 0 : i64, tpu.core_type = #tpu.core_type<tc>, window_params = [{transform_indices = @transform_0, window_bounds = array<i64: 8, 56>}, {transform_indices = @transform_1, window_bounds = array<i64: 8, 1>}, {pipeline_mode = #tpu.pipeline_mode<synchronous>, transform_indices = @transform_2, window_bounds = array<i64: 16, 56>}, {pipeline_mode = #tpu.pipeline_mode<synchronous>, transform_indices = @transform_3, window_bounds = array<i64: 16, 1>}, {pipeline_mode = #tpu.pipeline_mode<synchronous>, transform_indices = @transform_4, window_bounds = array<i64: 56, 128>}, {pipeline_mode = #tpu.pipeline_mode<synchronous>, transform_indices = @transform_5, window_bounds = array<i64: 1, 128>}, {transform_indices = @transform_6, window_bounds = array<i64: 8, 128>}, {pipeline_mode = #tpu.pipeline_mode<synchronous>, transform_indices = @transform_7, window_bounds = array<i64: 16, 128>}, {pipeline_mode = #tpu.pipeline_mode<synchronous>, transform_indices = @transform_8, window_bounds = array<i64: 8, 128>}]} {
    %c0 = arith.constant 0 : index
    %c0_0 = arith.constant 0 : index
    %0 = vector.load %arg5[%c0, %c0_0] : memref<56x128xbf16, #tpu.memory_space<vmem>>, vector<56x128xbf16>
    %c0_1 = arith.constant 0 : index
    %c0_2 = arith.constant 0 : index
    %1 = vector.load %arg6[%c0_1, %c0_2] : memref<1x128xf32, #tpu.memory_space<vmem>>, vector<1x128xf32>
    %c0_i32 = arith.constant 0 : i32
    %2 = arith.cmpi eq, %arg0, %c0_i32 : i32
    %3 = arith.extui %2 : i1 to i32
    %c0_i32_3 = arith.constant 0 : i32
    %4 = arith.cmpi ne, %3, %c0_i32_3 : i32
    scf.if %4 {
      %cst_19 = arith.constant 0.000000e+00 : f32
      %25 = vector.broadcast %cst_19 : f32 to vector<8x128xf32>
      %c0_20 = arith.constant 0 : index
      %c0_21 = arith.constant 0 : index
      %26 = vector.load %arg9[%c0_20, %c0_21] : memref<8x128xf32, #tpu.memory_space<vmem>>, vector<8x128xf32>
      tpu.vector_store %arg9[%c0_20, %c0_21], %25 {strides = array<i32>} : memref<8x128xf32, #tpu.memory_space<vmem>>, vector<8x128xf32>,
      %c0_22 = arith.constant 0 : index
      %c0_23 = arith.constant 0 : index
      %27 = vector.load %arg3[%c0_22, %c0_23] : memref<16x56xbf16, #tpu.memory_space<vmem>>, vector<16x56xbf16>
      %cst_24 = arith.constant dense<0.000000e+00> : vector<16x128xf32>
      %28 = tpu.matmul %27, %0, %cst_24 {dimension_numbers = #tpu.dot_dimension_numbers<[1], [0], [0], [1], [0, 0, 1, 1], [], []>} : vector<16x56xbf16>, vector<56x128xbf16>, vector<16x128xf32> -> vector<16x128xf32>
      %29 = vector.broadcast %1 : vector<1x128xf32> to vector<16x128xf32>
      %30 = arith.addf %28, %29 : vector<16x128xf32>
      %31 = arith.truncf %30 : vector<16x128xf32> to vector<16x128xbf16>
      %c0_25 = arith.constant 0 : index
      %c0_26 = arith.constant 0 : index
      %32 = vector.load %arg8[%c0_25, %c0_26] : memref<16x128xbf16, #tpu.memory_space<vmem>>, vector<16x128xbf16>
      tpu.vector_store %arg8[%c0_25, %c0_26], %31 {strides = array<i32>} : memref<16x128xbf16, #tpu.memory_space<vmem>>, vector<16x128xbf16>,
      %c0_27 = arith.constant 0 : index
      %c0_28 = arith.constant 0 : index
      %33 = vector.load %arg4[%c0_27, %c0_28] : memref<16x1xf32, #tpu.memory_space<vmem>>, vector<16x1xf32>
      %34 = vector.broadcast %33 : vector<16x1xf32> to vector<16x128xf32>
      %35 = arith.mulf %30, %34 : vector<16x128xf32>
      %cst_29 = arith.constant dense<0.000000e+00> : vector<128xf32>
      %36 = vector.multi_reduction <add>, %35, %cst_29 [0] : vector<16x128xf32> to vector<128xf32>
      %37 = vector.shape_cast %36 : vector<128xf32> to vector<1x128xf32>
      %c2 = arith.constant 2 : index
      %c0_30 = arith.constant 0 : index
      %38 = vector.load %arg9[%c2, %c0_30] : memref<8x128xf32, #tpu.memory_space<vmem>>, vector<1x128xf32>
      tpu.vector_store %arg9[%c2, %c0_30], %37 {strides = array<i32>} : memref<8x128xf32, #tpu.memory_space<vmem>>, vector<1x128xf32>,
      %39 = arith.mulf %35, %30 : vector<16x128xf32>
      %cst_31 = arith.constant dense<0.000000e+00> : vector<128xf32>
      %40 = vector.multi_reduction <add>, %39, %cst_31 [0] : vector<16x128xf32> to vector<128xf32>
      %41 = vector.shape_cast %40 : vector<128xf32> to vector<1x128xf32>
      %c3 = arith.constant 3 : index
      %c0_32 = arith.constant 0 : index
      %42 = vector.load %arg9[%c3, %c0_32] : memref<8x128xf32, #tpu.memory_space<vmem>>, vector<1x128xf32>
      tpu.vector_store %arg9[%c3, %c0_32], %41 {strides = array<i32>} : memref<8x128xf32, #tpu.memory_space<vmem>>, vector<1x128xf32>,
    } else {
    }
    %c0_4 = arith.constant 0 : index
    %c0_5 = arith.constant 0 : index
    %5 = vector.load %arg1[%c0_4, %c0_5] : memref<8x56xbf16, #tpu.memory_space<vmem>>, vector<8x56xbf16>
    %cst = arith.constant dense<0.000000e+00> : vector<8x128xf32>
    %6 = tpu.matmul %5, %0, %cst {dimension_numbers = #tpu.dot_dimension_numbers<[1], [0], [0], [1], [0, 0, 1, 1], [], []>} : vector<8x56xbf16>, vector<56x128xbf16>, vector<8x128xf32> -> vector<8x128xf32>
    %7 = vector.broadcast %1 : vector<1x128xf32> to vector<8x128xf32>
    %8 = arith.addf %6, %7 : vector<8x128xf32>
    %9 = arith.truncf %8 : vector<8x128xf32> to vector<8x128xbf16>
    %c0_6 = arith.constant 0 : index
    %c0_7 = arith.constant 0 : index
    %10 = vector.load %arg7[%c0_6, %c0_7] : memref<8x128xbf16, #tpu.memory_space<vmem>>, vector<8x128xbf16>
    tpu.vector_store %arg7[%c0_6, %c0_7], %9 {strides = array<i32>} : memref<8x128xbf16, #tpu.memory_space<vmem>>, vector<8x128xbf16>,
    %c0_8 = arith.constant 0 : index
    %c0_9 = arith.constant 0 : index
    %11 = vector.load %arg2[%c0_8, %c0_9] : memref<8x1xf32, #tpu.memory_space<vmem>>, vector<8x1xf32>
    %12 = vector.broadcast %11 : vector<8x1xf32> to vector<8x128xf32>
    %13 = arith.mulf %8, %12 : vector<8x128xf32>
    %c0_10 = arith.constant 0 : index
    %c0_11 = arith.constant 0 : index
    %14 = vector.load %arg9[%c0_10, %c0_11] : memref<8x128xf32, #tpu.memory_space<vmem>>, vector<1x128xf32>
    %cst_12 = arith.constant dense<0.000000e+00> : vector<128xf32>
    %15 = vector.multi_reduction <add>, %13, %cst_12 [0] : vector<8x128xf32> to vector<128xf32>
    %16 = vector.shape_cast %15 : vector<128xf32> to vector<1x128xf32>
    %17 = arith.addf %14, %16 : vector<1x128xf32>
    %c0_13 = arith.constant 0 : index
    %c0_14 = arith.constant 0 : index
    %18 = vector.load %arg9[%c0_13, %c0_14] : memref<8x128xf32, #tpu.memory_space<vmem>>, vector<1x128xf32>
    tpu.vector_store %arg9[%c0_13, %c0_14], %17 {strides = array<i32>} : memref<8x128xf32, #tpu.memory_space<vmem>>, vector<1x128xf32>,
    %c1 = arith.constant 1 : index
    %c0_15 = arith.constant 0 : index
    %19 = vector.load %arg9[%c1, %c0_15] : memref<8x128xf32, #tpu.memory_space<vmem>>, vector<1x128xf32>
    %20 = arith.mulf %13, %8 : vector<8x128xf32>
    %cst_16 = arith.constant dense<0.000000e+00> : vector<128xf32>
    %21 = vector.multi_reduction <add>, %20, %cst_16 [0] : vector<8x128xf32> to vector<128xf32>
    %22 = vector.shape_cast %21 : vector<128xf32> to vector<1x128xf32>
    %23 = arith.addf %19, %22 : vector<1x128xf32>
    %c1_17 = arith.constant 1 : index
    %c0_18 = arith.constant 0 : index
    %24 = vector.load %arg9[%c1_17, %c0_18] : memref<8x128xf32, #tpu.memory_space<vmem>>, vector<1x128xf32>
    tpu.vector_store %arg9[%c1_17, %c0_18], %23 {strides = array<i32>} : memref<8x128xf32, #tpu.memory_space<vmem>>, vector<1x128xf32>,
    return
  }
  func.func @transform_0(%arg0: i32) -> (i32, i32) {
    %c0_i32 = arith.constant 0 : i32
    %c0_i32_0 = arith.constant 0 : i32
    return %arg0, %c0_i32 : i32, i32
  }
  func.func @transform_1(%arg0: i32) -> (i32, i32) {
    %c0_i32 = arith.constant 0 : i32
    %c0_i32_0 = arith.constant 0 : i32
    return %arg0, %c0_i32 : i32, i32
  }
  func.func @transform_2(%arg0: i32) -> (i32, i32) {
    %c0_i32 = arith.constant 0 : i32
    %c0_i32_0 = arith.constant 0 : i32
    %c0_i32_1 = arith.constant 0 : i32
    return %c0_i32, %c0_i32_0 : i32, i32
  }
  func.func @transform_3(%arg0: i32) -> (i32, i32) {
    %c0_i32 = arith.constant 0 : i32
    %c0_i32_0 = arith.constant 0 : i32
    %c0_i32_1 = arith.constant 0 : i32
    return %c0_i32, %c0_i32_0 : i32, i32
  }
  func.func @transform_4(%arg0: i32) -> (i32, i32) {
    %c0_i32 = arith.constant 0 : i32
    %c0_i32_0 = arith.constant 0 : i32
    %c0_i32_1 = arith.constant 0 : i32
    return %c0_i32, %c0_i32_0 : i32, i32
  }
  func.func @transform_5(%arg0: i32) -> (i32, i32) {
    %c0_i32 = arith.constant 0 : i32
    %c0_i32_0 = arith.constant 0 : i32
    %c0_i32_1 = arith.constant 0 : i32
    return %c0_i32, %c0_i32_0 : i32, i32
  }
  func.func @transform_6(%arg0: i32) -> (i32, i32) {
    %c0_i32 = arith.constant 0 : i32
    %c0_i32_0 = arith.constant 0 : i32
    return %arg0, %c0_i32 : i32, i32
  }
  func.func @transform_7(%arg0: i32) -> (i32, i32) {
    %c0_i32 = arith.constant 0 : i32
    %c0_i32_0 = arith.constant 0 : i32
    %c0_i32_1 = arith.constant 0 : i32
    return %c0_i32, %c0_i32_0 : i32, i32
  }
  func.func @transform_8(%arg0: i32) -> (i32, i32) {
    %c0_i32 = arith.constant 0 : i32
    %c0_i32_0 = arith.constant 0 : i32
    %c0_i32_1 = arith.constant 0 : i32
    return %c0_i32, %c0_i32_0 : i32, i32
  }
}

module attributes {stable_mosaic.version = 11 : i64} {
  func.func @kernel(%arg0: i32, %arg1: memref<1x8xf32, #tpu.memory_space<vmem>>, %arg2: memref<8x128xbf16, #tpu.memory_space<vmem>>, %arg3: memref<8x128xbf16, #tpu.memory_space<vmem>>, %arg4: memref<1x1x8xf32, #tpu.memory_space<vmem>>, %arg5: memref<128x33xbf16, #tpu.memory_space<vmem>>, %arg6: memref<128x32xbf16, #tpu.memory_space<vmem>>, %arg7: memref<32x128xbf16, #tpu.memory_space<vmem>>, %arg8: memref<1x8x32xf32, #tpu.memory_space<vmem>>, %arg9: memref<1x32xf32, #tpu.memory_space<vmem>>, %arg10: memref<1x1x128xf32, #tpu.memory_space<vmem>>) attributes {dimension_semantics = [#tpu.dimension_semantics<parallel>], iteration_bounds = array<i64: 2>, scalar_prefetch = 0 : i64, scratch_operands = 0 : i64, tpu.core_type = #tpu.core_type<tc>, window_params = [{pipeline_mode = #tpu.pipeline_mode<synchronous>, transform_indices = @transform_0, window_bounds = array<i64: 1, 8>}, {transform_indices = @transform_1, window_bounds = array<i64: 8, 128>}, {transform_indices = @transform_2, window_bounds = array<i64: 8, 128>}, {transform_indices = @transform_3, window_bounds = array<i64: 1, 1, 8>}, {pipeline_mode = #tpu.pipeline_mode<synchronous>, transform_indices = @transform_4, window_bounds = array<i64: 128, 33>}, {pipeline_mode = #tpu.pipeline_mode<synchronous>, transform_indices = @transform_5, window_bounds = array<i64: 128, 32>}, {pipeline_mode = #tpu.pipeline_mode<synchronous>, transform_indices = @transform_6, window_bounds = array<i64: 32, 128>}, {pipeline_mode = #tpu.pipeline_mode<synchronous>, transform_indices = @transform_7, window_bounds = array<i64: 1, 8, 32>}, {pipeline_mode = #tpu.pipeline_mode<synchronous>, transform_indices = @transform_8, window_bounds = array<i64: 1, 32>}, {transform_indices = @transform_9, window_bounds = array<i64: 1, 1, 128>}]} {
    %c0 = arith.constant 0 : index
    %c0_0 = arith.constant 0 : index
    %0 = vector.load %arg1[%c0, %c0_0] : memref<1x8xf32, #tpu.memory_space<vmem>>, vector<1x8xf32>
    %1 = vector.extract_strided_slice %0 {offsets = [0, 0], sizes = [1, 1], strides = [1, 1]} : vector<1x8xf32> to vector<1x1xf32>
    %2 = vector.extract_strided_slice %0 {offsets = [0, 1], sizes = [1, 1], strides = [1, 1]} : vector<1x8xf32> to vector<1x1xf32>
    %3 = vector.extract_strided_slice %0 {offsets = [0, 2], sizes = [1, 1], strides = [1, 1]} : vector<1x8xf32> to vector<1x1xf32>
    %4 = vector.extract_strided_slice %0 {offsets = [0, 3], sizes = [1, 1], strides = [1, 1]} : vector<1x8xf32> to vector<1x1xf32>
    %5 = vector.extract_strided_slice %0 {offsets = [0, 4], sizes = [1, 1], strides = [1, 1]} : vector<1x8xf32> to vector<1x1xf32>
    %c0_1 = arith.constant 0 : index
    %c0_2 = arith.constant 0 : index
    %6 = vector.load %arg5[%c0_1, %c0_2] : memref<128x33xbf16, #tpu.memory_space<vmem>>, vector<128x33xbf16>
    %c0_3 = arith.constant 0 : index
    %c0_4 = arith.constant 0 : index
    %7 = vector.load %arg7[%c0_3, %c0_4] : memref<32x128xbf16, #tpu.memory_space<vmem>>, vector<32x128xbf16>
    %c0_5 = arith.constant 0 : index
    %c0_6 = arith.constant 0 : index
    %8 = vector.load %arg9[%c0_5, %c0_6] : memref<1x32xf32, #tpu.memory_space<vmem>>, vector<1x32xf32>
    %c0_7 = arith.constant 0 : index
    %c0_8 = arith.constant 0 : index
    %c0_9 = arith.constant 0 : index
    %9 = vector.load %arg4[%c0_7, %c0_8, %c0_9] : memref<1x1x8xf32, #tpu.memory_space<vmem>>, vector<1x1x8xf32>
    %c0_10 = arith.constant 0 : index
    %c0_11 = arith.constant 0 : index
    %10 = vector.load %arg3[%c0_10, %c0_11] : memref<8x128xbf16, #tpu.memory_space<vmem>>, vector<8x128xbf16>
    %11 = arith.extf %10 : vector<8x128xbf16> to vector<8x128xf32>
    %12 = vector.broadcast %3 : vector<1x1xf32> to vector<8x128xf32>
    %13 = arith.subf %11, %12 : vector<8x128xf32>
    %14 = vector.broadcast %4 : vector<1x1xf32> to vector<8x128xf32>
    %15 = arith.mulf %13, %14 : vector<8x128xf32>
    %16 = arith.truncf %15 : vector<8x128xf32> to vector<8x128xbf16>
    %c0_12 = arith.constant 0 : index
    %c0_13 = arith.constant 0 : index
    %17 = vector.load %arg6[%c0_12, %c0_13] : memref<128x32xbf16, #tpu.memory_space<vmem>>, vector<128x32xbf16>
    %cst = arith.constant dense<0.000000e+00> : vector<8x32xf32>
    %18 = tpu.matmul %16, %17, %cst {dimension_numbers = #tpu.dot_dimension_numbers<[1], [0], [0], [1], [0, 0, 1, 1], [], []>} : vector<8x128xbf16>, vector<128x32xbf16>, vector<8x32xf32> -> vector<8x32xf32>
    %cst_14 = arith.constant 0.000000e+00 : f32
    %19 = vector.broadcast %cst_14 : f32 to vector<8x32xf32>
    %20 = arith.maximumf %18, %19 : vector<8x32xf32>
    %21 = vector.shape_cast %20 : vector<8x32xf32> to vector<1x8x32xf32>
    %c0_15 = arith.constant 0 : index
    %c0_16 = arith.constant 0 : index
    %c0_17 = arith.constant 0 : index
    %22 = vector.load %arg8[%c0_15, %c0_16, %c0_17] : memref<1x8x32xf32, #tpu.memory_space<vmem>>, vector<1x8x32xf32>
    %23 = arith.mulf %21, %22 : vector<1x8x32xf32>
    %cst_18 = arith.constant 0.000000e+00 : f32
    %24 = vector.broadcast %cst_18 : f32 to vector<1x8x32xf32>
    %25 = arith.maximumf %23, %24 : vector<1x8x32xf32>
    %26 = arith.truncf %25 : vector<1x8x32xf32> to vector<1x8x32xbf16>
    %c0_19 = arith.constant 0 : index
    %c0_20 = arith.constant 0 : index
    %27 = vector.load %arg2[%c0_19, %c0_20] : memref<8x128xbf16, #tpu.memory_space<vmem>>, vector<8x128xbf16>
    %28 = arith.extf %27 : vector<8x128xbf16> to vector<8x128xf32>
    %29 = vector.broadcast %1 : vector<1x1xf32> to vector<8x128xf32>
    %30 = arith.subf %28, %29 : vector<8x128xf32>
    %31 = vector.broadcast %2 : vector<1x1xf32> to vector<8x128xf32>
    %32 = arith.mulf %30, %31 : vector<8x128xf32>
    %33 = arith.truncf %32 : vector<8x128xf32> to vector<8x128xbf16>
    %cst_21 = arith.constant dense<0.000000e+00> : vector<8x33xf32>
    %34 = tpu.matmul %33, %6, %cst_21 {dimension_numbers = #tpu.dot_dimension_numbers<[1], [0], [0], [1], [0, 0, 1, 1], [], []>} : vector<8x128xbf16>, vector<128x33xbf16>, vector<8x33xf32> -> vector<8x33xf32>
    %35 = vector.extract_strided_slice %34 {offsets = [0, 0], sizes = [8, 32], strides = [1, 1]} : vector<8x33xf32> to vector<8x32xf32>
    %cst_22 = arith.constant 0.000000e+00 : f32
    %36 = vector.broadcast %cst_22 : f32 to vector<8x32xf32>
    %37 = arith.maximumf %35, %36 : vector<8x32xf32>
    %38 = vector.shape_cast %37 : vector<8x32xf32> to vector<1x8x32xf32>
    %39 = arith.truncf %38 : vector<1x8x32xf32> to vector<1x8x32xbf16>
    "tpu.trace_start"() <{level = 10 : i32, message = "gmk,gnk->gmn"}> : () -> ()
    %cst_23 = arith.constant dense<0.000000e+00> : vector<1x8x8xf32>
    %40 = tpu.matmul %26, %39, %cst_23 {dimension_numbers = #tpu.dot_dimension_numbers<[2], [2], [1], [1], [0, 0, 0, 1, 1, 1], [0], [0]>} : vector<1x8x32xbf16>, vector<1x8x32xbf16>, vector<1x8x8xf32> -> vector<1x8x8xf32>
    "tpu.trace_stop"() : () -> ()
    %41 = vector.broadcast %9 : vector<1x1x8xf32> to vector<1x8x8xf32>
    %42 = arith.addf %40, %41 : vector<1x8x8xf32>
    %cst_24 = arith.constant dense<0xFF800000> : vector<1x8xf32>
    %43 = vector.multi_reduction <maximumf>, %42, %cst_24 [2] : vector<1x8x8xf32> to vector<1x8xf32>
    %44 = vector.shape_cast %43 : vector<1x8xf32> to vector<1x8x1xf32>
    %45 = vector.broadcast %44 : vector<1x8x1xf32> to vector<1x8x8xf32>
    %46 = arith.subf %42, %45 : vector<1x8x8xf32>
    %47 = math.exp %46 : vector<1x8x8xf32>
    %cst_25 = arith.constant dense<0.000000e+00> : vector<1x8xf32>
    %48 = vector.multi_reduction <add>, %47, %cst_25 [2] : vector<1x8x8xf32> to vector<1x8xf32>
    %49 = vector.shape_cast %48 : vector<1x8xf32> to vector<1x8x1xf32>
    %50 = tpu.reciprocal %49 {approx = true} : vector<1x8x1xf32> -> vector<1x8x1xf32>
    %51 = vector.broadcast %50 : vector<1x8x1xf32> to vector<1x8x8xf32>
    %52 = arith.mulf %47, %51 : vector<1x8x8xf32>
    %53 = arith.truncf %52 : vector<1x8x8xf32> to vector<1x8x8xbf16>
    "tpu.trace_start"() <{level = 10 : i32, message = "gmn,gmk->gnk"}> : () -> ()
    %cst_26 = arith.constant dense<0.000000e+00> : vector<1x8x32xf32>
    %54 = tpu.matmul %53, %26, %cst_26 {dimension_numbers = #tpu.dot_dimension_numbers<[1], [1], [2], [2], [0, 0, 0, 2, 1, 2], [0], [0]>} : vector<1x8x8xbf16>, vector<1x8x32xbf16>, vector<1x8x32xf32> -> vector<1x8x32xf32>
    "tpu.trace_stop"() : () -> ()
    %cst_27 = arith.constant 0.000000e+00 : f32
    %55 = vector.broadcast %cst_27 : f32 to vector<1x8x32xf32>
    %56 = arith.maximumf %54, %55 : vector<1x8x32xf32>
    %57 = vector.shape_cast %56 : vector<1x8x32xf32> to vector<8x32xf32>
    %58 = arith.truncf %57 : vector<8x32xf32> to vector<8x32xbf16>
    %cst_28 = arith.constant dense<0.000000e+00> : vector<8x128xf32>
    %59 = tpu.matmul %58, %7, %cst_28 {dimension_numbers = #tpu.dot_dimension_numbers<[1], [0], [0], [1], [0, 0, 1, 1], [], []>} : vector<8x32xbf16>, vector<32x128xbf16>, vector<8x128xf32> -> vector<8x128xf32>
    %60 = vector.extract_strided_slice %34 {offsets = [0, 32], sizes = [8, 1], strides = [1, 1]} : vector<8x33xf32> to vector<8x1xf32>
    %61 = vector.broadcast %8 : vector<1x32xf32> to vector<8x32xf32>
    %62 = arith.mulf %57, %61 : vector<8x32xf32>
    %cst_29 = arith.constant dense<0.000000e+00> : vector<8xf32>
    %63 = vector.multi_reduction <add>, %62, %cst_29 [1] : vector<8x32xf32> to vector<8xf32>
    %64 = vector.shape_cast %63 : vector<8xf32> to vector<8x1xf32>
    %65 = arith.addf %60, %64 : vector<8x1xf32>
    %66 = vector.broadcast %5 : vector<1x1xf32> to vector<8x1xf32>
    %67 = arith.addf %65, %66 : vector<8x1xf32>
    %cst_30 = arith.constant 0.000000e+00 : f32
    %68 = vector.broadcast %cst_30 : f32 to vector<8x1xf32>
    %69 = arith.subf %68, %67 : vector<8x1xf32>
    %70 = math.exp %69 : vector<8x1xf32>
    %cst_31 = arith.constant 1.000000e+00 : f32
    %71 = vector.broadcast %cst_31 : f32 to vector<8x1xf32>
    %72 = arith.addf %71, %70 : vector<8x1xf32>
    %cst_32 = arith.constant 1.000000e+00 : f32
    %73 = vector.broadcast %cst_32 : f32 to vector<8x1xf32>
    %74 = arith.divf %73, %72 : vector<8x1xf32>
    %75 = arith.subf %59, %32 : vector<8x128xf32>
    %76 = vector.broadcast %74 : vector<8x1xf32> to vector<8x128xf32>
    %77 = arith.mulf %76, %75 : vector<8x128xf32>
    %78 = arith.addf %32, %77 : vector<8x128xf32>
    %79 = arith.truncf %78 : vector<8x128xf32> to vector<8x128xbf16>
    %cst_33 = arith.constant dense<0.000000e+00> : vector<8x33xf32>
    %80 = tpu.matmul %79, %6, %cst_33 {dimension_numbers = #tpu.dot_dimension_numbers<[1], [0], [0], [1], [0, 0, 1, 1], [], []>} : vector<8x128xbf16>, vector<128x33xbf16>, vector<8x33xf32> -> vector<8x33xf32>
    %81 = vector.extract_strided_slice %80 {offsets = [0, 0], sizes = [8, 32], strides = [1, 1]} : vector<8x33xf32> to vector<8x32xf32>
    %cst_34 = arith.constant 0.000000e+00 : f32
    %82 = vector.broadcast %cst_34 : f32 to vector<8x32xf32>
    %83 = arith.maximumf %81, %82 : vector<8x32xf32>
    %84 = vector.shape_cast %83 : vector<8x32xf32> to vector<1x8x32xf32>
    %85 = arith.truncf %84 : vector<1x8x32xf32> to vector<1x8x32xbf16>
    "tpu.trace_start"() <{level = 10 : i32, message = "gmk,gnk->gmn"}> : () -> ()
    %cst_35 = arith.constant dense<0.000000e+00> : vector<1x8x8xf32>
    %86 = tpu.matmul %26, %85, %cst_35 {dimension_numbers = #tpu.dot_dimension_numbers<[2], [2], [1], [1], [0, 0, 0, 1, 1, 1], [0], [0]>} : vector<1x8x32xbf16>, vector<1x8x32xbf16>, vector<1x8x8xf32> -> vector<1x8x8xf32>
    "tpu.trace_stop"() : () -> ()
    %87 = vector.broadcast %9 : vector<1x1x8xf32> to vector<1x8x8xf32>
    %88 = arith.addf %86, %87 : vector<1x8x8xf32>
    %cst_36 = arith.constant dense<0xFF800000> : vector<1x8xf32>
    %89 = vector.multi_reduction <maximumf>, %88, %cst_36 [2] : vector<1x8x8xf32> to vector<1x8xf32>
    %90 = vector.shape_cast %89 : vector<1x8xf32> to vector<1x8x1xf32>
    %91 = vector.broadcast %90 : vector<1x8x1xf32> to vector<1x8x8xf32>
    %92 = arith.subf %88, %91 : vector<1x8x8xf32>
    %93 = math.exp %92 : vector<1x8x8xf32>
    %cst_37 = arith.constant dense<0.000000e+00> : vector<1x8xf32>
    %94 = vector.multi_reduction <add>, %93, %cst_37 [2] : vector<1x8x8xf32> to vector<1x8xf32>
    %95 = vector.shape_cast %94 : vector<1x8xf32> to vector<1x8x1xf32>
    %96 = tpu.reciprocal %95 {approx = true} : vector<1x8x1xf32> -> vector<1x8x1xf32>
    %97 = vector.broadcast %96 : vector<1x8x1xf32> to vector<1x8x8xf32>
    %98 = arith.mulf %93, %97 : vector<1x8x8xf32>
    %99 = arith.truncf %98 : vector<1x8x8xf32> to vector<1x8x8xbf16>
    "tpu.trace_start"() <{level = 10 : i32, message = "gmn,gmk->gnk"}> : () -> ()
    %cst_38 = arith.constant dense<0.000000e+00> : vector<1x8x32xf32>
    %100 = tpu.matmul %99, %26, %cst_38 {dimension_numbers = #tpu.dot_dimension_numbers<[1], [1], [2], [2], [0, 0, 0, 2, 1, 2], [0], [0]>} : vector<1x8x8xbf16>, vector<1x8x32xbf16>, vector<1x8x32xf32> -> vector<1x8x32xf32>
    "tpu.trace_stop"() : () -> ()
    %cst_39 = arith.constant 0.000000e+00 : f32
    %101 = vector.broadcast %cst_39 : f32 to vector<1x8x32xf32>
    %102 = arith.maximumf %100, %101 : vector<1x8x32xf32>
    %103 = vector.shape_cast %102 : vector<1x8x32xf32> to vector<8x32xf32>
    %104 = arith.truncf %103 : vector<8x32xf32> to vector<8x32xbf16>
    %cst_40 = arith.constant dense<0.000000e+00> : vector<8x128xf32>
    %105 = tpu.matmul %104, %7, %cst_40 {dimension_numbers = #tpu.dot_dimension_numbers<[1], [0], [0], [1], [0, 0, 1, 1], [], []>} : vector<8x32xbf16>, vector<32x128xbf16>, vector<8x128xf32> -> vector<8x128xf32>
    %106 = vector.extract_strided_slice %80 {offsets = [0, 32], sizes = [8, 1], strides = [1, 1]} : vector<8x33xf32> to vector<8x1xf32>
    %107 = vector.broadcast %8 : vector<1x32xf32> to vector<8x32xf32>
    %108 = arith.mulf %103, %107 : vector<8x32xf32>
    %cst_41 = arith.constant dense<0.000000e+00> : vector<8xf32>
    %109 = vector.multi_reduction <add>, %108, %cst_41 [1] : vector<8x32xf32> to vector<8xf32>
    %110 = vector.shape_cast %109 : vector<8xf32> to vector<8x1xf32>
    %111 = arith.addf %106, %110 : vector<8x1xf32>
    %112 = vector.broadcast %5 : vector<1x1xf32> to vector<8x1xf32>
    %113 = arith.addf %111, %112 : vector<8x1xf32>
    %cst_42 = arith.constant 0.000000e+00 : f32
    %114 = vector.broadcast %cst_42 : f32 to vector<8x1xf32>
    %115 = arith.subf %114, %113 : vector<8x1xf32>
    %116 = math.exp %115 : vector<8x1xf32>
    %cst_43 = arith.constant 1.000000e+00 : f32
    %117 = vector.broadcast %cst_43 : f32 to vector<8x1xf32>
    %118 = arith.addf %117, %116 : vector<8x1xf32>
    %cst_44 = arith.constant 1.000000e+00 : f32
    %119 = vector.broadcast %cst_44 : f32 to vector<8x1xf32>
    %120 = arith.divf %119, %118 : vector<8x1xf32>
    %121 = arith.subf %105, %78 : vector<8x128xf32>
    %122 = vector.broadcast %120 : vector<8x1xf32> to vector<8x128xf32>
    %123 = arith.mulf %122, %121 : vector<8x128xf32>
    %124 = arith.addf %78, %123 : vector<8x128xf32>
    %125 = arith.truncf %124 : vector<8x128xf32> to vector<8x128xbf16>
    %cst_45 = arith.constant dense<0.000000e+00> : vector<8x33xf32>
    %126 = tpu.matmul %125, %6, %cst_45 {dimension_numbers = #tpu.dot_dimension_numbers<[1], [0], [0], [1], [0, 0, 1, 1], [], []>} : vector<8x128xbf16>, vector<128x33xbf16>, vector<8x33xf32> -> vector<8x33xf32>
    %127 = vector.extract_strided_slice %126 {offsets = [0, 0], sizes = [8, 32], strides = [1, 1]} : vector<8x33xf32> to vector<8x32xf32>
    %cst_46 = arith.constant 0.000000e+00 : f32
    %128 = vector.broadcast %cst_46 : f32 to vector<8x32xf32>
    %129 = arith.maximumf %127, %128 : vector<8x32xf32>
    %130 = vector.shape_cast %129 : vector<8x32xf32> to vector<1x8x32xf32>
    %131 = arith.truncf %130 : vector<1x8x32xf32> to vector<1x8x32xbf16>
    "tpu.trace_start"() <{level = 10 : i32, message = "gmk,gnk->gmn"}> : () -> ()
    %cst_47 = arith.constant dense<0.000000e+00> : vector<1x8x8xf32>
    %132 = tpu.matmul %26, %131, %cst_47 {dimension_numbers = #tpu.dot_dimension_numbers<[2], [2], [1], [1], [0, 0, 0, 1, 1, 1], [0], [0]>} : vector<1x8x32xbf16>, vector<1x8x32xbf16>, vector<1x8x8xf32> -> vector<1x8x8xf32>
    "tpu.trace_stop"() : () -> ()
    %133 = arith.truncf %132 : vector<1x8x8xf32> to vector<1x8x8xbf16>
    "tpu.trace_start"() <{level = 10 : i32, message = "gmn,gmk->gnk"}> : () -> ()
    %cst_48 = arith.constant dense<0.000000e+00> : vector<1x8x32xf32>
    %134 = tpu.matmul %133, %26, %cst_48 {dimension_numbers = #tpu.dot_dimension_numbers<[1], [1], [2], [2], [0, 0, 0, 2, 1, 2], [0], [0]>} : vector<1x8x8xbf16>, vector<1x8x32xbf16>, vector<1x8x32xf32> -> vector<1x8x32xf32>
    "tpu.trace_stop"() : () -> ()
    %135 = arith.mulf %130, %134 : vector<1x8x32xf32>
    %cst_49 = arith.constant dense<0.000000e+00> : vector<1x8xf32>
    %136 = vector.multi_reduction <add>, %135, %cst_49 [2] : vector<1x8x32xf32> to vector<1x8xf32>
    %cst_50 = arith.constant 0.000000e+00 : f32
    %137 = vector.broadcast %cst_50 : f32 to vector<1x8xf32>
    %138 = arith.subf %137, %136 : vector<1x8xf32>
    %139 = math.exp %138 : vector<1x8xf32>
    %cst_51 = arith.constant 1.000000e+00 : f32
    %140 = vector.broadcast %cst_51 : f32 to vector<1x8xf32>
    %141 = arith.addf %140, %139 : vector<1x8xf32>
    %cst_52 = arith.constant 1.000000e+00 : f32
    %142 = vector.broadcast %cst_52 : f32 to vector<1x8xf32>
    %143 = arith.divf %142, %141 : vector<1x8xf32>
    %cst_53 = arith.constant 0.000000e+00 : f32
    %144 = vector.broadcast %cst_53 : f32 to vector<1x120xf32>
    %145 = tpu.concatenate %143, %144 in 1 : vector<1x8xf32>, vector<1x120xf32> -> vector<1x128xf32>
    %146 = vector.shape_cast %145 : vector<1x128xf32> to vector<1x1x128xf32>
    %c0_54 = arith.constant 0 : index
    %c0_55 = arith.constant 0 : index
    %c0_56 = arith.constant 0 : index
    %147 = vector.load %arg10[%c0_54, %c0_55, %c0_56] : memref<1x1x128xf32, #tpu.memory_space<vmem>>, vector<1x1x128xf32>
    tpu.vector_store %arg10[%c0_54, %c0_55, %c0_56], %146 {strides = array<i32>} : memref<1x1x128xf32, #tpu.memory_space<vmem>>, vector<1x1x128xf32>,
    return
  }
  func.func @transform_0(%arg0: i32) -> (i32, i32) {
    %c0_i32 = arith.constant 0 : i32
    %c0_i32_0 = arith.constant 0 : i32
    %c0_i32_1 = arith.constant 0 : i32
    return %c0_i32, %c0_i32_0 : i32, i32
  }
  func.func @transform_1(%arg0: i32) -> (i32, i32) {
    %c0_i32 = arith.constant 0 : i32
    %c0_i32_0 = arith.constant 0 : i32
    return %arg0, %c0_i32 : i32, i32
  }
  func.func @transform_2(%arg0: i32) -> (i32, i32) {
    %c0_i32 = arith.constant 0 : i32
    %c0_i32_0 = arith.constant 0 : i32
    return %arg0, %c0_i32 : i32, i32
  }
  func.func @transform_3(%arg0: i32) -> (i32, i32, i32) {
    %c0_i32 = arith.constant 0 : i32
    %c0_i32_0 = arith.constant 0 : i32
    %c0_i32_1 = arith.constant 0 : i32
    return %arg0, %c0_i32, %c0_i32_0 : i32, i32, i32
  }
  func.func @transform_4(%arg0: i32) -> (i32, i32) {
    %c0_i32 = arith.constant 0 : i32
    %c0_i32_0 = arith.constant 0 : i32
    %c0_i32_1 = arith.constant 0 : i32
    return %c0_i32, %c0_i32_0 : i32, i32
  }
  func.func @transform_5(%arg0: i32) -> (i32, i32) {
    %c0_i32 = arith.constant 0 : i32
    %c0_i32_0 = arith.constant 0 : i32
    %c0_i32_1 = arith.constant 0 : i32
    return %c0_i32, %c0_i32_0 : i32, i32
  }
  func.func @transform_6(%arg0: i32) -> (i32, i32) {
    %c0_i32 = arith.constant 0 : i32
    %c0_i32_0 = arith.constant 0 : i32
    %c0_i32_1 = arith.constant 0 : i32
    return %c0_i32, %c0_i32_0 : i32, i32
  }
  func.func @transform_7(%arg0: i32) -> (i32, i32, i32) {
    %c0_i32 = arith.constant 0 : i32
    %c0_i32_0 = arith.constant 0 : i32
    %c0_i32_1 = arith.constant 0 : i32
    %c0_i32_2 = arith.constant 0 : i32
    return %c0_i32, %c0_i32_0, %c0_i32_1 : i32, i32, i32
  }
  func.func @transform_8(%arg0: i32) -> (i32, i32) {
    %c0_i32 = arith.constant 0 : i32
    %c0_i32_0 = arith.constant 0 : i32
    %c0_i32_1 = arith.constant 0 : i32
    return %c0_i32, %c0_i32_0 : i32, i32
  }
  func.func @transform_9(%arg0: i32) -> (i32, i32, i32) {
    %c0_i32 = arith.constant 0 : i32
    %c0_i32_0 = arith.constant 0 : i32
    %c0_i32_1 = arith.constant 0 : i32
    return %arg0, %c0_i32, %c0_i32_0 : i32, i32, i32
  }
}

</mosaic_0001>

<llo_original>
// kernel: forward.2
$region0: #{forward.2}
  #allocation0 [shape = 'u32[]', space=smem, size = 0x4, offset = 0x4, fixed_abs, tag = 'smem constant byte address 0x4 - core index']
  #allocation1 [shape = 'u32[144,128]{1,0:T(1,128)}', space=vmem, size = 0x12000, scoped, tag = 'internal scratch']
  %s0 = inlined_call_operand.vmem [shape: bf16[16,56], index: 0, kind: input, shape index: {}]
  %s1 = inlined_call_operand.vmem [shape: f32[16,1], index: 1, kind: input, shape index: {}]
  %s2 = inlined_call_operand.vmem [shape: bf16[16,56], index: 2, kind: input, shape index: {}]
  %s3 = inlined_call_operand.vmem [shape: f32[16,1], index: 3, kind: input, shape index: {}]
  %s4 = inlined_call_operand.vmem [shape: bf16[56,128], index: 4, kind: input, shape index: {}]
  %s5 = inlined_call_operand.vmem [shape: f32[1,128], index: 5, kind: input, shape index: {}]
  %s6 = inlined_call_operand.vmem [shape: bf16[16,128], index: 6, kind: output, shape index: {0}]
  %s7 = inlined_call_operand.vmem [shape: bf16[16,128], index: 7, kind: output, shape index: {1}]
  %s8 = inlined_call_operand.vmem [shape: f32[8,128], index: 8, kind: output, shape index: {2}]
  %9 = xla_tuple %s6, %s7, %s8
  %s10 = sld [smem:[#allocation0]]
  $region77: #{forward.2} parent=0
    _
  %s12 = ssub.s32 1, %s10
  %s13 = scalar_select 0, %s12, %s10
  loop: start=0, step=1, limit=4
  $region2: #{forward.2} parent=0 // loop_pre_header
    _
  $region3: #{forward.2} parent=0 // loop_header
    %s15 = sphi 0, %s19
    %p16 = scmp.ge.s32.totalorder %s15, 4
    %s25 = sphi 0, %s27
    %s28 = sphi 0, %s25
    %s29 = sphi 0, %s28
    %s45 = sphi 0, %s29
    %s51 = sphi 0, %s53
    %s54 = sphi 0, %s51
    %s55 = sphi 0, %s54
    %s71 = sphi 0, %s55
    %s75 = sphi 0, %s75
    %s77 = sphi 0, %s75
    %s78 = sphi 0, %s77
    %s92 = sphi 0, %s78
    %s96 = sphi 0, %s96
    %s98 = sphi 0, %s96
    %s99 = sphi 0, %s98
    %s113 = sphi 0, %s99
    %s117 = sphi 0, %s117
    %s119 = sphi 0, %s117
    %s120 = sphi 0, %s119
    %s134 = sphi 0, %s120
    %s138 = sphi 0, %s138
    %s140 = sphi 0, %s138
    %s141 = sphi 0, %s140
    %s155 = sphi 0, %s141
    %s161 = sphi 0, %s163
    %s164 = sphi 0, %s161
    %s165 = sphi 0, %s164
    %s181 = sphi 0, %s165
    %s185 = sphi 0, %s185
    %s187 = sphi 0, %s185
    %s188 = sphi 0, %s187
    %s202 = sphi 0, %s188
    %s206 = sphi 0, %s206
    %s208 = sphi 0, %s206
    %s209 = sphi 0, %s208
    %s223 = sphi 0, %s209
  $region4: #{forward.2} parent=0 // loop_header_branch
    %18 = sbr.rel (%p16) target = $region8
  $region5: #{forward.2} parent=0 // loop_body
    %s20 = ssub.s32 %s15, 1
    %s21 = ssub.s32 %s15, 2
    %s22 = sadd.s32 %s15, 1
    %s23 = ssub.s32 %s15, %s22
    %p24 = scmp.eq.s32.totalorder %s23, 0
    %s26 = sadd.s32 %s25, 1
    %s27 = scalar_select %p24, %s25, %s26
    %p30 = pneg %p24
    %p31 = scmp.eq.s32.totalorder %s15, 1
    %p32 = por %p30, %p31
    %p33 = scmp.ne.s32.totalorder %s25, %s28
    %p34 = scmp.eq.s32.totalorder %s15, 0
    %p35 = por %p33, %p34
    %p36 = scmp.ne.s32.totalorder %s25, %s28
    %p37 = scmp.eq.s32.totalorder %s20, 1
    %p38 = por %p36, %p37
    %p39 = scmp.ne.s32.totalorder %s28, %s29
    %p40 = scmp.eq.s32.totalorder %s20, 0
    %p41 = por %p39, %p40
    %p42 = scmp.ne.s32.totalorder %s28, %s29
    %p43 = scmp.eq.s32.totalorder %s21, 1
    %p44 = por %p42, %p43
    %p46 = scmp.ne.s32.totalorder %s29, %s45
    %p47 = scmp.eq.s32.totalorder %s21, 0
    %p48 = por %p46, %p47
    %s49 = ssub.s32 %s15, %s22
    %p50 = scmp.eq.s32.totalorder %s49, 0
    %s52 = sadd.s32 %s51, 1
    %s53 = scalar_select %p50, %s51, %s52
    %p56 = pneg %p50
    %p57 = scmp.eq.s32.totalorder %s15, 1
    %p58 = por %p56, %p57
    %p59 = scmp.ne.s32.totalorder %s51, %s54
    %p60 = scmp.eq.s32.totalorder %s15, 0
    %p61 = por %p59, %p60
    %p62 = scmp.ne.s32.totalorder %s51, %s54
    %p63 = scmp.eq.s32.totalorder %s20, 1
    %p64 = por %p62, %p63
    %p65 = scmp.ne.s32.totalorder %s54, %s55
    %p66 = scmp.eq.s32.totalorder %s20, 0
    %p67 = por %p65, %p66
    %p68 = scmp.ne.s32.totalorder %s54, %s55
    %p69 = scmp.eq.s32.totalorder %s21, 1
    %p70 = por %p68, %p69
    %p72 = scmp.ne.s32.totalorder %s55, %s71
    %p73 = scmp.eq.s32.totalorder %s21, 0
    %p74 = por %p72, %p73
    %s76 = sadd.s32 %s75, 1
    %p79 = scmp.eq.s32.totalorder %s15, 1
    %p80 = scmp.ne.s32.totalorder %s75, %s77
    %p81 = scmp.eq.s32.totalorder %s15, 0
    %p82 = por %p80, %p81
    %p83 = scmp.ne.s32.totalorder %s75, %s77
    %p84 = scmp.eq.s32.totalorder %s20, 1
    %p85 = por %p83, %p84
    %p86 = scmp.ne.s32.totalorder %s77, %s78
    %p87 = scmp.eq.s32.totalorder %s20, 0
    %p88 = por %p86, %p87
    %p89 = scmp.ne.s32.totalorder %s77, %s78
    %p90 = scmp.eq.s32.totalorder %s21, 1
    %p91 = por %p89, %p90
    %p93 = scmp.ne.s32.totalorder %s78, %s92
    %p94 = scmp.eq.s32.totalorder %s21, 0
    %p95 = por %p93, %p94
    %s97 = sadd.s32 %s96, 1
    %p100 = scmp.eq.s32.totalorder %s15, 1
    %p101 = scmp.ne.s32.totalorder %s96, %s98
    %p102 = scmp.eq.s32.totalorder %s15, 0
    %p103 = por %p101, %p102
    %p104 = scmp.ne.s32.totalorder %s96, %s98
    %p105 = scmp.eq.s32.totalorder %s20, 1
    %p106 = por %p104, %p105
    %p107 = scmp.ne.s32.totalorder %s98, %s99
    %p108 = scmp.eq.s32.totalorder %s20, 0
    %p109 = por %p107, %p108
    %p110 = scmp.ne.s32.totalorder %s98, %s99
    %p111 = scmp.eq.s32.totalorder %s21, 1
    %p112 = por %p110, %p111
    %p114 = scmp.ne.s32.totalorder %s99, %s113
    %p115 = scmp.eq.s32.totalorder %s21, 0
    %p116 = por %p114, %p115
    %s118 = sadd.s32 %s117, 1
    %p121 = scmp.eq.s32.totalorder %s15, 1
    %p122 = scmp.ne.s32.totalorder %s117, %s119
    %p123 = scmp.eq.s32.totalorder %s15, 0
    %p124 = por %p122, %p123
    %p125 = scmp.ne.s32.totalorder %s117, %s119
    %p126 = scmp.eq.s32.totalorder %s20, 1
    %p127 = por %p125, %p126
    %p128 = scmp.ne.s32.totalorder %s119, %s120
    %p129 = scmp.eq.s32.totalorder %s20, 0
    %p130 = por %p128, %p129
    %p131 = scmp.ne.s32.totalorder %s119, %s120
    %p132 = scmp.eq.s32.totalorder %s21, 1
    %p133 = por %p131, %p132
    %p135 = scmp.ne.s32.totalorder %s120, %s134
    %p136 = scmp.eq.s32.totalorder %s21, 0
    %p137 = por %p135, %p136
    %s139 = sadd.s32 %s138, 1
    %p142 = scmp.eq.s32.totalorder %s15, 1
    %p143 = scmp.ne.s32.totalorder %s138, %s140
    %p144 = scmp.eq.s32.totalorder %s15, 0
    %p145 = por %p143, %p144
    %p146 = scmp.ne.s32.totalorder %s138, %s140
    %p147 = scmp.eq.s32.totalorder %s20, 1
    %p148 = por %p146, %p147
    %p149 = scmp.ne.s32.totalorder %s140, %s141
    %p150 = scmp.eq.s32.totalorder %s20, 0
    %p151 = por %p149, %p150
    %p152 = scmp.ne.s32.totalorder %s140, %s141
    %p153 = scmp.eq.s32.totalorder %s21, 1
    %p154 = por %p152, %p153
    %p156 = scmp.ne.s32.totalorder %s141, %s155
    %p157 = scmp.eq.s32.totalorder %s21, 0
    %p158 = por %p156, %p157
    %s159 = ssub.s32 %s15, %s22
    %p160 = scmp.eq.s32.totalorder %s159, 0
    %s162 = sadd.s32 %s161, 1
    %s163 = scalar_select %p160, %s161, %s162
    %p166 = pneg %p160
    %p167 = scmp.eq.s32.totalorder %s15, 1
    %p168 = por %p166, %p167
    %p169 = scmp.ne.s32.totalorder %s161, %s164
    %p170 = scmp.eq.s32.totalorder %s15, 0
    %p171 = por %p169, %p170
    %p172 = scmp.ne.s32.totalorder %s161, %s164
    %p173 = scmp.eq.s32.totalorder %s20, 1
    %p174 = por %p172, %p173
    %p175 = scmp.ne.s32.totalorder %s164, %s165
    %p176 = scmp.eq.s32.totalorder %s20, 0
    %p177 = por %p175, %p176
    %p178 = scmp.ne.s32.totalorder %s164, %s165
    %p179 = scmp.eq.s32.totalorder %s21, 1
    %p180 = por %p178, %p179
    %p182 = scmp.ne.s32.totalorder %s165, %s181
    %p183 = scmp.eq.s32.totalorder %s21, 0
    %p184 = por %p182, %p183
    %s186 = sadd.s32 %s185, 1
    %p189 = scmp.eq.s32.totalorder %s15, 1
    %p190 = scmp.ne.s32.totalorder %s185, %s187
    %p191 = scmp.eq.s32.totalorder %s15, 0
    %p192 = por %p190, %p191
    %p193 = scmp.ne.s32.totalorder %s185, %s187
    %p194 = scmp.eq.s32.totalorder %s20, 1
    %p195 = por %p193, %p194
    %p196 = scmp.ne.s32.totalorder %s187, %s188
    %p197 = scmp.eq.s32.totalorder %s20, 0
    %p198 = por %p196, %p197
    %p199 = scmp.ne.s32.totalorder %s187, %s188
    %p200 = scmp.eq.s32.totalorder %s21, 1
    %p201 = por %p199, %p200
    %p203 = scmp.ne.s32.totalorder %s188, %s202
    %p204 = scmp.eq.s32.totalorder %s21, 0
    %p205 = por %p203, %p204
    %s207 = sadd.s32 %s206, 1
    %p210 = scmp.eq.s32.totalorder %s15, 1
    %p211 = scmp.ne.s32.totalorder %s206, %s208
    %p212 = scmp.eq.s32.totalorder %s15, 0
    %p213 = por %p211, %p212
    %p214 = scmp.ne.s32.totalorder %s206, %s208
    %p215 = scmp.eq.s32.totalorder %s20, 1
    %p216 = por %p214, %p215
    %p217 = scmp.ne.s32.totalorder %s208, %s209
    %p218 = scmp.eq.s32.totalorder %s20, 0
    %p219 = por %p217, %p218
    %p220 = scmp.ne.s32.totalorder %s208, %s209
    %p221 = scmp.eq.s32.totalorder %s21, 1
    %p222 = por %p220, %p221
    %p224 = scmp.ne.s32.totalorder %s209, %s223
    %p225 = scmp.eq.s32.totalorder %s21, 0
    %p226 = por %p224, %p225
    %p227 = scmp.le.s32.totalorder 1, %s15
    %p228 = scmp.lt.s32.totalorder %s15, 3
    %p229 = pnand %p227, %p228
    %p230 = pneg %p229
    // Predicated region
    $region9: #{forward.2} parent=5 // pred_check
      _
    $region10: #{forward.2} parent=5 // pred_check_branch
      %232 = sbr.rel (%p229) target = $region12
    $region11: #{forward.2} parent=5 // pred_region
      %s233 = ssub.s32 %s15, 1
      // Predicated region
      $region13: #{forward.2} parent=11 // pred_check
        %p234 = pneg %p88
      $region14: #{forward.2} parent=11 // pred_check_branch
        %236 = sbr.rel (%p234) target = $region16
      $region15: #{forward.2} parent=11 // pred_region
        _
      $region16: #{forward.2} parent=11 // pred_fallthru
        _
      // Predicated region
      $region17: #{forward.2} parent=11 // pred_check
        %p237 = pneg %p109
      $region18: #{forward.2} parent=11 // pred_check_branch
        %239 = sbr.rel (%p237) target = $region20
      $region19: #{forward.2} parent=11 // pred_region
        _
      $region20: #{forward.2} parent=11 // pred_fallthru
        _
      // Predicated region
      $region21: #{forward.2} parent=11 // pred_check
        %p240 = pneg %p130
      $region22: #{forward.2} parent=11 // pred_check_branch
        %242 = sbr.rel (%p240) target = $region24
      $region23: #{forward.2} parent=11 // pred_region
        _
      $region24: #{forward.2} parent=11 // pred_fallthru
        _
      // Predicated region
      $region25: #{forward.2} parent=11 // pred_check
        %p243 = pneg %p151
      $region26: #{forward.2} parent=11 // pred_check_branch
        %245 = sbr.rel (%p243) target = $region28
      $region27: #{forward.2} parent=11 // pred_region
        _
      $region28: #{forward.2} parent=11 // pred_fallthru
        _
    $region12: #{forward.2} parent=5 // pred_fallthru
      _
    %p246 = scmp.lt.s32.totalorder %s15, 2
    // Predicated region
    $region29: #{forward.2} parent=5 // pred_check
      %p247 = pneg %p246
    $region30: #{forward.2} parent=5 // pred_check_branch
      %249 = sbr.rel (%p247) target = $region32
    $region31: #{forward.2} parent=5 // pred_region
      // Predicated region
      $region33: #{forward.2} parent=31 // pred_check
        %p250 = pneg %p35
      $region34: #{forward.2} parent=31 // pred_check_branch
        %252 = sbr.rel (%p250) target = $region36
      $region35: #{forward.2} parent=31 // pred_region
        %p253 = scmp.lt.s32.totalorder %s15, 1
        %s254 = scalar_select %p253, %s15, 1
        %s255 = smul.addr %s254, 4
        %s256 = scalar_lea.vmem %s0, %s255
      $region36: #{forward.2} parent=31 // pred_fallthru
        _
      // Predicated region
      $region37: #{forward.2} parent=31 // pred_check
        %p257 = pneg %p61
      $region38: #{forward.2} parent=31 // pred_check_branch
        %259 = sbr.rel (%p257) target = $region40
      $region39: #{forward.2} parent=31 // pred_region
        %p260 = scmp.lt.s32.totalorder %s15, 1
        %s261 = scalar_select %p260, %s15, 1
        %s262 = smul.addr %s261, 8
        %s263 = scalar_lea.vmem %s1, %s262
      $region40: #{forward.2} parent=31 // pred_fallthru
        _
    $region32: #{forward.2} parent=5 // pred_fallthru
      _
    %p264 = scmp.le.s32.totalorder 1, %s15
    %p265 = scmp.lt.s32.totalorder %s15, 3
    %p266 = pnand %p264, %p265
    %p267 = pneg %p266
    // Predicated region
    $region41: #{forward.2} parent=5 // pred_check
      _
    $region42: #{forward.2} parent=5 // pred_check_branch
      %269 = sbr.rel (%p266) target = $region44
    $region43: #{forward.2} parent=5 // pred_region
      %s270 = ssub.s32 %s15, 1
      %p271 = scmp.lt.s32.totalorder %s20, 1
      %s272 = scalar_select %p271, %s20, 1
      %s273 = smul.addr %s272, 4
      %s274 = scalar_lea.vmem %s0, %s273
      %p275 = pneg %p41
      %p276 = pneg %p38
      %p277 = scmp.lt.s32.totalorder %s20, 1
      %s278 = scalar_select %p277, %s20, 1
      %s279 = smul.addr %s278, 8
      %s280 = scalar_lea.vmem %s1, %s279
      %p281 = pneg %p67
      %p282 = pneg %p64
      %p283 = pneg %p88
      %p284 = pneg %p85
      %p285 = pneg %p109
      %p286 = pneg %p106
      %p287 = pneg %p130
      %p288 = pneg %p127
      %p289 = pneg %p151
      %p290 = pneg %p148
      %p291 = pneg %p177
      %p292 = pneg %p174
      %p293 = scmp.lt.s32.totalorder %s20, 1
      %s294 = scalar_select %p293, %s20, 1
      %s295 = smul.addr %s294, 4
      %s296 = scalar_lea.vmem %s6, %s295
      %p297 = pneg %p198
      %p298 = pneg %p195
      %p299 = pneg %p219
      %p300 = pneg %p216
      %p301 = scmp.lt.s32.totalorder %s20, 1
      %s302 = scalar_select %p301, %s20, 1
      %s303 = smul.addr %s302, 4
      %s304 = scalar_lea.vmem %s0, %s303
      %p305 = scmp.lt.s32.totalorder %s20, 1
      %s306 = scalar_select %p305, %s20, 1
      %s307 = smul.addr %s306, 8
      %s308 = scalar_lea.vmem %s1, %s307
      %p309 = scmp.lt.s32.totalorder %s20, 1
      %s310 = scalar_select %p309, %s20, 1
      %s311 = smul.addr %s310, 4
      %s312 = scalar_lea.vmem %s6, %s311
      %v314 = vld [vmem:[%s4] sm:$0xf]
      %v315 = vld [vmem:[%s4 + $0x4] sm:$0xf]
      %v316 = vld [vmem:[%s4 + $0x8] sm:$0xf]
      %v317 = vld [vmem:[%s4 + $0xc] sm:$0xf]
      %v318 = vld [vmem:[%s4 + $0x10] sm:$0xf]
      %v319 = vld [vmem:[%s4 + $0x14] sm:$0xf]
      %v320 = vld [vmem:[%s4 + $0x18] sm:$0xf]
      %v321 = vld [vmem:[%s5] sm:$0x1]
      %p322 = scmp.eq.s32.totalorder %s20, 0
      // Predicated region
      $region45: #{forward.2} parent=43 // pred_check
        %p323 = pneg %p322
      $region46: #{forward.2} parent=43 // pred_check_branch
        %325 = sbr.rel (%p323) target = $region48
      $region47: #{forward.2} parent=43 // pred_region
        %326 = vst [vmem:[%s8] sm:$0xff] 0.0
        %v327 = vld [vmem:[%s2] sm:$0xf]
        %v328 = vld [vmem:[%s2 + $0x4] sm:$0xf]
        %v330 = vlaneseq
        %v331 = vshrl.u32 %v330, 7
        %v332 = vsub.s32 0, %v331
        %v333 = vrot.slane %v321, %v332
        %v337 = vunpack.c.l.b16 %v327
        %v338 = vunpack.c.l.b16 %v328
        %v339 = vpack.c.b16 %v338, %v337
        %v347 = vunpack.c.l.b16 %v314
        %v348 = vunpack.c.l.b16 %v315
        %v349 = vunpack.c.l.b16 %v316
        %v350 = vunpack.c.l.b16 %v317
        %v351 = vunpack.c.l.b16 %v318
        %v352 = vunpack.c.l.b16 %v319
        %v353 = vunpack.c.l.b16 %v320
        %v354 = vpack.c.b16 %v348, %v347
        %v355 = vpack.c.b16 %v350, %v349
        %v356 = vpack.c.b16 %v352, %v351
        %v357 = vpack.c.b16 %v353, %v353
        %vm361 = vcmask 457728
        %v363 = vsel %vm361, %v339, 0
        %vm365 = vcmask 1043456
        %v367 = vsel %vm365, %v357, 0
        %369 = vmatprep.subr.bf16.mxu0 0
        %370 = vmatpush1.bf16.msra.mxu0 0
        %371 = vmatprep.subr.bf16.mxu0 0
        %372 = vmatpush1.bf16.msra.mxu0 0
        %373 = vmatprep.subr.bf16.mxu0 0
        %374 = vmatpush1.bf16.msra.mxu0 0
        %375 = vmatprep.subr.bf16.mxu0 0
        %376 = vmatpush1.bf16.msra.mxu0 0
        %377 = vmatprep.subr.bf16.mxu0 0
        %378 = vmatpush1.bf16.msra.mxu0 %v367
        %379 = vmatprep.subr.bf16.mxu0 0
        %380 = vmatpush1.bf16.msra.mxu0 %v356
        %381 = vmatprep.subr.bf16.mxu0 0
        %382 = vmatpush1.bf16.msra.mxu0 %v355
        %383 = vmatprep.subr.bf16.mxu0 0
        %384 = vmatpush1.bf16.msra.mxu0 %v354
        %385 = vmatprep.subr.bf16.mxu0 0
        %386 = vmatpush2.bf16.msra.mxu0 0
        %387 = vmatprep.subr.bf16.mxu0 0
        %388 = vmatpush2.bf16.msra.mxu0 0
        %389 = vmatprep.subr.bf16.mxu0 0
        %390 = vmatpush2.bf16.msra.mxu0 0
        %391 = vmatprep.subr.bf16.mxu0 0
        %392 = vmatpush2.bf16.msra.mxu0 0
        %393 = vmatprep.subr.bf16.mxu0 0
        %394 = vmatpush2.bf16.msra.mxu0 0
        %395 = vmatprep.subr.bf16.mxu0 0
        %396 = vmatpush2.bf16.msra.mxu0 0
        %397 = vmatprep.subr.bf16.mxu0 0
        %398 = vmatpush2.bf16.msra.mxu0 0
        %399 = vmatprep.subr.bf16.mxu0 0
        %400 = vmatpush2.bf16.msra.mxu0 0
        %401 = vmatprep.mubr.bf16.mxu0 0
        %402 = vmatmul.mubr.bf16.gmra.mxu0 %v363
        %v403 = vpop.f32.mrf.mxu0
        %v404 = vadd.f32 %v333, %v403
        %v405 = vpop.f32.mrf.mxu0
        %v406 = vpop.f32.mrf.mxu0
        %v407 = vadd.f32 %v333, %v406
        %v408 = vpop.f32.mrf.mxu0
        %409 = vdwg.mxu0
        %v410 = vpack.c.bf16 %v407, %v404
        %v412 = vunpack.c.l.b16 %v410
        %v413 = vunpack.c.h.b16 %v410
        %v414 = vpack.c.b16 %v412, %v412
        %v415 = vpack.c.b16 %v413, %v413
        %418 = vst [vmem:[%s7] sm:$0xf] %v414
        %419 = vst [vmem:[%s7 + $0x4] sm:$0xf] %v415
        %v420 = vld [vmem:[%s3] sm:$0xff]
        %v421 = vld [vmem:[%s3 + $0x8] sm:$0xff]
        %423 = vset.pattern.permute.xlu0 0
        %424 = vperm.xlu0 %423, %v420
        %v425 = vpop.permute.xlu0 %424
        %428 = vset.pattern.permute.xlu0 0
        %429 = vperm.xlu0 %428, %v421
        %v430 = vpop.permute.xlu0 %429
        %v432 = vmul.f32 %v404, %v425
        %v433 = vmul.f32 %v407, %v430
        %v434 = vadd.f32 %v432, %v433
        %v435 = vrot.slane %v434, 4
        %v436 = vadd.f32 %v434, %v435
        %v437 = vrot.slane %v436, 2
        %v438 = vadd.f32 %v436, %v437
        %v439 = vrot.slane %v438, 1
        %v440 = vadd.f32 %v438, %v439
        %441 = vst [vmem:[%s8 + $0x2] sm:$0x1] %v440
        %v442 = vmul.f32 %v432, %v404
        %v443 = vmul.f32 %v433, %v407
        %v444 = vadd.f32 %v442, %v443
        %v445 = vrot.slane %v444, 4
        %v446 = vadd.f32 %v444, %v445
        %v447 = vrot.slane %v446, 2
        %v448 = vadd.f32 %v446, %v447
        %v449 = vrot.slane %v448, 1
        %v450 = vadd.f32 %v448, %v449
        %451 = vst [vmem:[%s8 + $0x3] sm:$0x1] %v450
      $region48: #{forward.2} parent=43 // pred_fallthru
        _
      %v452 = vld [vmem:[%s304] sm:$0xf]
      %v454 = vlaneseq
      %v455 = vshrl.u32 %v454, 7
      %v456 = vsub.s32 0, %v455
      %v457 = vrot.slane %v321, %v456
      %v466 = vunpack.c.l.b16 %v314
      %v467 = vunpack.c.l.b16 %v315
      %v468 = vunpack.c.l.b16 %v316
      %v469 = vunpack.c.l.b16 %v317
      %v470 = vunpack.c.l.b16 %v318
      %v471 = vunpack.c.l.b16 %v319
      %v472 = vunpack.c.l.b16 %v320
      %v473 = vpack.c.b16 %v467, %v466
      %v474 = vpack.c.b16 %v469, %v468
      %v475 = vpack.c.b16 %v471, %v470
      %v476 = vpack.c.b16 %v472, %v472
      %vm480 = vcmask 457728
      %v482 = vsel %vm480, %v452, 0
      %vm484 = vcmask 1043456
      %v486 = vsel %vm484, %v476, 0
      %488 = vmatprep.subr.bf16.mxu0 0
      %489 = vmatpush1.bf16.msra.mxu0 0
      %490 = vmatprep.subr.bf16.mxu0 0
      %491 = vmatpush1.bf16.msra.mxu0 0
      %492 = vmatprep.subr.bf16.mxu0 0
      %493 = vmatpush1.bf16.msra.mxu0 0
      %494 = vmatprep.subr.bf16.mxu0 0
      %495 = vmatpush1.bf16.msra.mxu0 0
      %496 = vmatprep.subr.bf16.mxu0 0
      %497 = vmatpush1.bf16.msra.mxu0 %v486
      %498 = vmatprep.subr.bf16.mxu0 0
      %499 = vmatpush1.bf16.msra.mxu0 %v475
      %500 = vmatprep.subr.bf16.mxu0 0
      %501 = vmatpush1.bf16.msra.mxu0 %v474
      %502 = vmatprep.subr.bf16.mxu0 0
      %503 = vmatpush1.bf16.msra.mxu0 %v473
      %504 = vmatprep.subr.bf16.mxu0 0
      %505 = vmatpush2.bf16.msra.mxu0 0
      %506 = vmatprep.subr.bf16.mxu0 0
      %507 = vmatpush2.bf16.msra.mxu0 0
      %508 = vmatprep.subr.bf16.mxu0 0
      %509 = vmatpush2.bf16.msra.mxu0 0
      %510 = vmatprep.subr.bf16.mxu0 0
      %511 = vmatpush2.bf16.msra.mxu0 0
      %512 = vmatprep.subr.bf16.mxu0 0
      %513 = vmatpush2.bf16.msra.mxu0 0
      %514 = vmatprep.subr.bf16.mxu0 0
      %515 = vmatpush2.bf16.msra.mxu0 0
      %516 = vmatprep.subr.bf16.mxu0 0
      %517 = vmatpush2.bf16.msra.mxu0 0
      %518 = vmatprep.subr.bf16.mxu0 0
      %519 = vmatpush2.bf16.msra.mxu0 0
      %520 = vmatprep.mubr.bf16.mxu0 0
      %521 = vmatmul.mubr.bf16.gmra.mxu0 %v482
      %v522 = vpop.f32.mrf.mxu0
      %v523 = vadd.f32 %v457, %v522
      %v524 = vpop.f32.mrf.mxu0
      %v525 = vpop.f32.mrf.mxu0
      %v526 = vpop.f32.mrf.mxu0
      %527 = vdwg.mxu0
      %v528 = vpack.c.bf16 %v523, %v523
      %529 = vst [vmem:[%s312] sm:$0xf] %v528
      %v530 = vld [vmem:[%s308] sm:$0xff]
      %532 = vset.pattern.permute.xlu0 0
      %533 = vperm.xlu0 %532, %v530
      %v534 = vpop.permute.xlu0 %533
      %v536 = vmul.f32 %v523, %v534
      %v537 = vld [vmem:[%s8] sm:$0x1]
      %v538 = vrot.slane %v536, 4
      %v539 = vadd.f32 %v536, %v538
      %v540 = vrot.slane %v539, 2
      %v541 = vadd.f32 %v539, %v540
      %v542 = vrot.slane %v541, 1
      %v543 = vadd.f32 %v541, %v542
      %v544 = vadd.f32 %v537, %v543
      %545 = vst [vmem:[%s8] sm:$0x1] %v544
      %v546 = vld [vmem:[%s8 + $0x1] sm:$0x1]
      %v547 = vmul.f32 %v536, %v523
      %v548 = vrot.slane %v547, 4
      %v549 = vadd.f32 %v547, %v548
      %v550 = vrot.slane %v549, 2
      %v551 = vadd.f32 %v549, %v550
      %v552 = vrot.slane %v551, 1
      %v553 = vadd.f32 %v551, %v552
      %v554 = vadd.f32 %v546, %v553
      %555 = vst [vmem:[%s8 + $0x1] sm:$0x1] %v554
      %p556 = scmp.lt.s32.totalorder %s20, 1
      %s557 = scalar_select %p556, %s20, 1
      %s558 = smul.addr %s557, 4
      %s559 = scalar_lea.vmem %s6, %s558
      // Predicated region
      $region49: #{forward.2} parent=43 // pred_check
        %p560 = pneg %p174
      $region50: #{forward.2} parent=43 // pred_check_branch
        %562 = sbr.rel (%p560) target = $region52
      $region51: #{forward.2} parent=43 // pred_region
        _
      $region52: #{forward.2} parent=43 // pred_fallthru
        _
      // Predicated region
      $region53: #{forward.2} parent=43 // pred_check
        %p563 = pneg %p195
      $region54: #{forward.2} parent=43 // pred_check_branch
        %565 = sbr.rel (%p563) target = $region56
      $region55: #{forward.2} parent=43 // pred_region
        _
      $region56: #{forward.2} parent=43 // pred_fallthru
        _
      // Predicated region
      $region57: #{forward.2} parent=43 // pred_check
        %p566 = pneg %p216
      $region58: #{forward.2} parent=43 // pred_check_branch
        %568 = sbr.rel (%p566) target = $region60
      $region59: #{forward.2} parent=43 // pred_region
        _
      $region60: #{forward.2} parent=43 // pred_fallthru
        _
      // Predicated region
      $region61: #{forward.2} parent=43 // pred_check
        %p569 = pneg %p195
      $region62: #{forward.2} parent=43 // pred_check_branch
        %571 = sbr.rel (%p569) target = $region64
      $region63: #{forward.2} parent=43 // pred_region
        _
      $region64: #{forward.2} parent=43 // pred_fallthru
        _
      // Predicated region
      $region65: #{forward.2} parent=43 // pred_check
        %p572 = pneg %p216
      $region66: #{forward.2} parent=43 // pred_check_branch
        %574 = sbr.rel (%p572) target = $region68
      $region67: #{forward.2} parent=43 // pred_region
        _
      $region68: #{forward.2} parent=43 // pred_fallthru
        _
    $region44: #{forward.2} parent=5 // pred_fallthru
      _
    %p575 = scmp.le.s32.totalorder 2, %s15
    // Predicated region
    $region69: #{forward.2} parent=5 // pred_check
      %p576 = pneg %p575
    $region70: #{forward.2} parent=5 // pred_check_branch
      %578 = sbr.rel (%p576) target = $region72
    $region71: #{forward.2} parent=5 // pred_region
      %s579 = ssub.s32 %s15, 2
      // Predicated region
      $region73: #{forward.2} parent=71 // pred_check
        %p580 = pneg %p180
      $region74: #{forward.2} parent=71 // pred_check_branch
        %582 = sbr.rel (%p580) target = $region76
      $region75: #{forward.2} parent=71 // pred_region
        %p583 = scmp.lt.s32.totalorder %s21, 1
        %s584 = scalar_select %p583, %s21, 1
        %s585 = smul.addr %s584, 4
        %s586 = scalar_lea.vmem %s6, %s585
      $region76: #{forward.2} parent=71 // pred_fallthru
        _
    $region72: #{forward.2} parent=5 // pred_fallthru
      _
  $region6: #{forward.2} parent=0 // loop_footer
    %s19 = sadd.s32 1, %s15
  $region7: #{forward.2} parent=0 // loop_footer_branch
    %14 = sbr.rel target = $region3
  $region8: #{forward.2} parent=0 // loop_exit
    _

// kernel: forward.3
$region0: #{forward.3}
  #allocation0 [shape = 'u32[]', space=smem, size = 0x4, offset = 0x4, fixed_abs, tag = 'smem constant byte address 0x4 - core index']
  #allocation1 [shape = 'u32[144,128]{1,0:T(1,128)}', space=vmem, size = 0x12000, scoped, tag = 'internal scratch']
  %s0 = inlined_call_operand.vmem [shape: f32[1,8], index: 0, kind: input, shape index: {}]
  %s1 = inlined_call_operand.vmem [shape: bf16[16,128], index: 1, kind: input, shape index: {}]
  %s2 = inlined_call_operand.vmem [shape: bf16[16,128], index: 2, kind: input, shape index: {}]
  %s3 = inlined_call_operand.vmem [shape: f32[2,1,8], index: 3, kind: input, shape index: {}]
  %s4 = inlined_call_operand.vmem [shape: bf16[128,33], index: 4, kind: input, shape index: {}]
  %s5 = inlined_call_operand.vmem [shape: bf16[128,32], index: 5, kind: input, shape index: {}]
  %s6 = inlined_call_operand.vmem [shape: bf16[32,128], index: 6, kind: input, shape index: {}]
  %s7 = inlined_call_operand.vmem [shape: f32[1,8,32], index: 7, kind: input, shape index: {}]
  %s8 = inlined_call_operand.vmem [shape: f32[1,32], index: 8, kind: input, shape index: {}]
  %s9 = inlined_call_operand.vmem [shape: f32[2,1,128], index: 9, kind: output, shape index: {}]
  %s10 = sld [smem:[#allocation0]]
  $region69: #{forward.3} parent=0
    _
  %s12 = ssub.s32 1, %s10
  %s13 = scalar_select 0, %s12, %s10
  loop: start=0, step=1, limit=4
  $region2: #{forward.3} parent=0 // loop_pre_header
    _
  $region3: #{forward.3} parent=0 // loop_header
    %s15 = sphi 0, %s19
    %p16 = scmp.ge.s32.totalorder %s15, 4
    %s23 = sphi 0, %s23
    %s25 = sphi 0, %s23
    %s26 = sphi 0, %s25
    %s40 = sphi 0, %s26
    %s46 = sphi 0, %s48
    %s49 = sphi 0, %s46
    %s50 = sphi 0, %s49
    %s66 = sphi 0, %s50
    %s72 = sphi 0, %s74
    %s75 = sphi 0, %s72
    %s76 = sphi 0, %s75
    %s92 = sphi 0, %s76
    %s98 = sphi 0, %s100
    %s101 = sphi 0, %s98
    %s102 = sphi 0, %s101
    %s118 = sphi 0, %s102
    %s122 = sphi 0, %s122
    %s124 = sphi 0, %s122
    %s125 = sphi 0, %s124
    %s139 = sphi 0, %s125
    %s143 = sphi 0, %s143
    %s145 = sphi 0, %s143
    %s146 = sphi 0, %s145
    %s160 = sphi 0, %s146
    %s164 = sphi 0, %s164
    %s166 = sphi 0, %s164
    %s167 = sphi 0, %s166
    %s181 = sphi 0, %s167
    %s185 = sphi 0, %s185
    %s187 = sphi 0, %s185
    %s188 = sphi 0, %s187
    %s202 = sphi 0, %s188
    %s206 = sphi 0, %s206
    %s208 = sphi 0, %s206
    %s209 = sphi 0, %s208
    %s223 = sphi 0, %s209
    %s229 = sphi 0, %s231
    %s232 = sphi 0, %s229
    %s233 = sphi 0, %s232
    %s249 = sphi 0, %s233
  $region4: #{forward.3} parent=0 // loop_header_branch
    %18 = sbr.rel (%p16) target = $region8
  $region5: #{forward.3} parent=0 // loop_body
    %s20 = ssub.s32 %s15, 1
    %s21 = ssub.s32 %s15, 2
    %s22 = sadd.s32 %s15, 1
    %s24 = sadd.s32 %s23, 1
    %p27 = scmp.eq.s32.totalorder %s15, 1
    %p28 = scmp.ne.s32.totalorder %s23, %s25
    %p29 = scmp.eq.s32.totalorder %s15, 0
    %p30 = por %p28, %p29
    %p31 = scmp.ne.s32.totalorder %s23, %s25
    %p32 = scmp.eq.s32.totalorder %s20, 1
    %p33 = por %p31, %p32
    %p34 = scmp.ne.s32.totalorder %s25, %s26
    %p35 = scmp.eq.s32.totalorder %s20, 0
    %p36 = por %p34, %p35
    %p37 = scmp.ne.s32.totalorder %s25, %s26
    %p38 = scmp.eq.s32.totalorder %s21, 1
    %p39 = por %p37, %p38
    %p41 = scmp.ne.s32.totalorder %s26, %s40
    %p42 = scmp.eq.s32.totalorder %s21, 0
    %p43 = por %p41, %p42
    %s44 = ssub.s32 %s15, %s22
    %p45 = scmp.eq.s32.totalorder %s44, 0
    %s47 = sadd.s32 %s46, 1
    %s48 = scalar_select %p45, %s46, %s47
    %p51 = pneg %p45
    %p52 = scmp.eq.s32.totalorder %s15, 1
    %p53 = por %p51, %p52
    %p54 = scmp.ne.s32.totalorder %s46, %s49
    %p55 = scmp.eq.s32.totalorder %s15, 0
    %p56 = por %p54, %p55
    %p57 = scmp.ne.s32.totalorder %s46, %s49
    %p58 = scmp.eq.s32.totalorder %s20, 1
    %p59 = por %p57, %p58
    %p60 = scmp.ne.s32.totalorder %s49, %s50
    %p61 = scmp.eq.s32.totalorder %s20, 0
    %p62 = por %p60, %p61
    %p63 = scmp.ne.s32.totalorder %s49, %s50
    %p64 = scmp.eq.s32.totalorder %s21, 1
    %p65 = por %p63, %p64
    %p67 = scmp.ne.s32.totalorder %s50, %s66
    %p68 = scmp.eq.s32.totalorder %s21, 0
    %p69 = por %p67, %p68
    %s70 = ssub.s32 %s15, %s22
    %p71 = scmp.eq.s32.totalorder %s70, 0
    %s73 = sadd.s32 %s72, 1
    %s74 = scalar_select %p71, %s72, %s73
    %p77 = pneg %p71
    %p78 = scmp.eq.s32.totalorder %s15, 1
    %p79 = por %p77, %p78
    %p80 = scmp.ne.s32.totalorder %s72, %s75
    %p81 = scmp.eq.s32.totalorder %s15, 0
    %p82 = por %p80, %p81
    %p83 = scmp.ne.s32.totalorder %s72, %s75
    %p84 = scmp.eq.s32.totalorder %s20, 1
    %p85 = por %p83, %p84
    %p86 = scmp.ne.s32.totalorder %s75, %s76
    %p87 = scmp.eq.s32.totalorder %s20, 0
    %p88 = por %p86, %p87
    %p89 = scmp.ne.s32.totalorder %s75, %s76
    %p90 = scmp.eq.s32.totalorder %s21, 1
    %p91 = por %p89, %p90
    %p93 = scmp.ne.s32.totalorder %s76, %s92
    %p94 = scmp.eq.s32.totalorder %s21, 0
    %p95 = por %p93, %p94
    %s96 = ssub.s32 %s15, %s22
    %p97 = scmp.eq.s32.totalorder %s96, 0
    %s99 = sadd.s32 %s98, 1
    %s100 = scalar_select %p97, %s98, %s99
    %p103 = pneg %p97
    %p104 = scmp.eq.s32.totalorder %s15, 1
    %p105 = por %p103, %p104
    %p106 = scmp.ne.s32.totalorder %s98, %s101
    %p107 = scmp.eq.s32.totalorder %s15, 0
    %p108 = por %p106, %p107
    %p109 = scmp.ne.s32.totalorder %s98, %s101
    %p110 = scmp.eq.s32.totalorder %s20, 1
    %p111 = por %p109, %p110
    %p112 = scmp.ne.s32.totalorder %s101, %s102
    %p113 = scmp.eq.s32.totalorder %s20, 0
    %p114 = por %p112, %p113
    %p115 = scmp.ne.s32.totalorder %s101, %s102
    %p116 = scmp.eq.s32.totalorder %s21, 1
    %p117 = por %p115, %p116
    %p119 = scmp.ne.s32.totalorder %s102, %s118
    %p120 = scmp.eq.s32.totalorder %s21, 0
    %p121 = por %p119, %p120
    %s123 = sadd.s32 %s122, 1
    %p126 = scmp.eq.s32.totalorder %s15, 1
    %p127 = scmp.ne.s32.totalorder %s122, %s124
    %p128 = scmp.eq.s32.totalorder %s15, 0
    %p129 = por %p127, %p128
    %p130 = scmp.ne.s32.totalorder %s122, %s124
    %p131 = scmp.eq.s32.totalorder %s20, 1
    %p132 = por %p130, %p131
    %p133 = scmp.ne.s32.totalorder %s124, %s125
    %p134 = scmp.eq.s32.totalorder %s20, 0
    %p135 = por %p133, %p134
    %p136 = scmp.ne.s32.totalorder %s124, %s125
    %p137 = scmp.eq.s32.totalorder %s21, 1
    %p138 = por %p136, %p137
    %p140 = scmp.ne.s32.totalorder %s125, %s139
    %p141 = scmp.eq.s32.totalorder %s21, 0
    %p142 = por %p140, %p141
    %s144 = sadd.s32 %s143, 1
    %p147 = scmp.eq.s32.totalorder %s15, 1
    %p148 = scmp.ne.s32.totalorder %s143, %s145
    %p149 = scmp.eq.s32.totalorder %s15, 0
    %p150 = por %p148, %p149
    %p151 = scmp.ne.s32.totalorder %s143, %s145
    %p152 = scmp.eq.s32.totalorder %s20, 1
    %p153 = por %p151, %p152
    %p154 = scmp.ne.s32.totalorder %s145, %s146
    %p155 = scmp.eq.s32.totalorder %s20, 0
    %p156 = por %p154, %p155
    %p157 = scmp.ne.s32.totalorder %s145, %s146
    %p158 = scmp.eq.s32.totalorder %s21, 1
    %p159 = por %p157, %p158
    %p161 = scmp.ne.s32.totalorder %s146, %s160
    %p162 = scmp.eq.s32.totalorder %s21, 0
    %p163 = por %p161, %p162
    %s165 = sadd.s32 %s164, 1
    %p168 = scmp.eq.s32.totalorder %s15, 1
    %p169 = scmp.ne.s32.totalorder %s164, %s166
    %p170 = scmp.eq.s32.totalorder %s15, 0
    %p171 = por %p169, %p170
    %p172 = scmp.ne.s32.totalorder %s164, %s166
    %p173 = scmp.eq.s32.totalorder %s20, 1
    %p174 = por %p172, %p173
    %p175 = scmp.ne.s32.totalorder %s166, %s167
    %p176 = scmp.eq.s32.totalorder %s20, 0
    %p177 = por %p175, %p176
    %p178 = scmp.ne.s32.totalorder %s166, %s167
    %p179 = scmp.eq.s32.totalorder %s21, 1
    %p180 = por %p178, %p179
    %p182 = scmp.ne.s32.totalorder %s167, %s181
    %p183 = scmp.eq.s32.totalorder %s21, 0
    %p184 = por %p182, %p183
    %s186 = sadd.s32 %s185, 1
    %p189 = scmp.eq.s32.totalorder %s15, 1
    %p190 = scmp.ne.s32.totalorder %s185, %s187
    %p191 = scmp.eq.s32.totalorder %s15, 0
    %p192 = por %p190, %p191
    %p193 = scmp.ne.s32.totalorder %s185, %s187
    %p194 = scmp.eq.s32.totalorder %s20, 1
    %p195 = por %p193, %p194
    %p196 = scmp.ne.s32.totalorder %s187, %s188
    %p197 = scmp.eq.s32.totalorder %s20, 0
    %p198 = por %p196, %p197
    %p199 = scmp.ne.s32.totalorder %s187, %s188
    %p200 = scmp.eq.s32.totalorder %s21, 1
    %p201 = por %p199, %p200
    %p203 = scmp.ne.s32.totalorder %s188, %s202
    %p204 = scmp.eq.s32.totalorder %s21, 0
    %p205 = por %p203, %p204
    %s207 = sadd.s32 %s206, 1
    %p210 = scmp.eq.s32.totalorder %s15, 1
    %p211 = scmp.ne.s32.totalorder %s206, %s208
    %p212 = scmp.eq.s32.totalorder %s15, 0
    %p213 = por %p211, %p212
    %p214 = scmp.ne.s32.totalorder %s206, %s208
    %p215 = scmp.eq.s32.totalorder %s20, 1
    %p216 = por %p214, %p215
    %p217 = scmp.ne.s32.totalorder %s208, %s209
    %p218 = scmp.eq.s32.totalorder %s20, 0
    %p219 = por %p217, %p218
    %p220 = scmp.ne.s32.totalorder %s208, %s209
    %p221 = scmp.eq.s32.totalorder %s21, 1
    %p222 = por %p220, %p221
    %p224 = scmp.ne.s32.totalorder %s209, %s223
    %p225 = scmp.eq.s32.totalorder %s21, 0
    %p226 = por %p224, %p225
    %s227 = ssub.s32 %s15, %s22
    %p228 = scmp.eq.s32.totalorder %s227, 0
    %s230 = sadd.s32 %s229, 1
    %s231 = scalar_select %p228, %s229, %s230
    %p234 = pneg %p228
    %p235 = scmp.eq.s32.totalorder %s15, 1
    %p236 = por %p234, %p235
    %p237 = scmp.ne.s32.totalorder %s229, %s232
    %p238 = scmp.eq.s32.totalorder %s15, 0
    %p239 = por %p237, %p238
    %p240 = scmp.ne.s32.totalorder %s229, %s232
    %p241 = scmp.eq.s32.totalorder %s20, 1
    %p242 = por %p240, %p241
    %p243 = scmp.ne.s32.totalorder %s232, %s233
    %p244 = scmp.eq.s32.totalorder %s20, 0
    %p245 = por %p243, %p244
    %p246 = scmp.ne.s32.totalorder %s232, %s233
    %p247 = scmp.eq.s32.totalorder %s21, 1
    %p248 = por %p246, %p247
    %p250 = scmp.ne.s32.totalorder %s233, %s249
    %p251 = scmp.eq.s32.totalorder %s21, 0
    %p252 = por %p250, %p251
    %p253 = scmp.le.s32.totalorder 1, %s15
    %p254 = scmp.lt.s32.totalorder %s15, 3
    %p255 = pnand %p253, %p254
    %p256 = pneg %p255
    // Predicated region
    $region9: #{forward.3} parent=5 // pred_check
      _
    $region10: #{forward.3} parent=5 // pred_check_branch
      %258 = sbr.rel (%p255) target = $region12
    $region11: #{forward.3} parent=5 // pred_region
      %s259 = ssub.s32 %s15, 1
      // Predicated region
      $region13: #{forward.3} parent=11 // pred_check
        %p260 = pneg %p36
      $region14: #{forward.3} parent=11 // pred_check_branch
        %262 = sbr.rel (%p260) target = $region16
      $region15: #{forward.3} parent=11 // pred_region
        _
      $region16: #{forward.3} parent=11 // pred_fallthru
        _
      // Predicated region
      $region17: #{forward.3} parent=11 // pred_check
        %p263 = pneg %p135
      $region18: #{forward.3} parent=11 // pred_check_branch
        %265 = sbr.rel (%p263) target = $region20
      $region19: #{forward.3} parent=11 // pred_region
        _
      $region20: #{forward.3} parent=11 // pred_fallthru
        _
      // Predicated region
      $region21: #{forward.3} parent=11 // pred_check
        %p266 = pneg %p156
      $region22: #{forward.3} parent=11 // pred_check_branch
        %268 = sbr.rel (%p266) target = $region24
      $region23: #{forward.3} parent=11 // pred_region
        _
      $region24: #{forward.3} parent=11 // pred_fallthru
        _
      // Predicated region
      $region25: #{forward.3} parent=11 // pred_check
        %p269 = pneg %p177
      $region26: #{forward.3} parent=11 // pred_check_branch
        %271 = sbr.rel (%p269) target = $region28
      $region27: #{forward.3} parent=11 // pred_region
        _
      $region28: #{forward.3} parent=11 // pred_fallthru
        _
      // Predicated region
      $region29: #{forward.3} parent=11 // pred_check
        %p272 = pneg %p198
      $region30: #{forward.3} parent=11 // pred_check_branch
        %274 = sbr.rel (%p272) target = $region32
      $region31: #{forward.3} parent=11 // pred_region
        _
      $region32: #{forward.3} parent=11 // pred_fallthru
        _
      // Predicated region
      $region33: #{forward.3} parent=11 // pred_check
        %p275 = pneg %p219
      $region34: #{forward.3} parent=11 // pred_check_branch
        %277 = sbr.rel (%p275) target = $region36
      $region35: #{forward.3} parent=11 // pred_region
        _
      $region36: #{forward.3} parent=11 // pred_fallthru
        _
    $region12: #{forward.3} parent=5 // pred_fallthru
      _
    %p278 = scmp.lt.s32.totalorder %s15, 2
    // Predicated region
    $region37: #{forward.3} parent=5 // pred_check
      %p279 = pneg %p278
    $region38: #{forward.3} parent=5 // pred_check_branch
      %281 = sbr.rel (%p279) target = $region40
    $region39: #{forward.3} parent=5 // pred_region
      // Predicated region
      $region41: #{forward.3} parent=39 // pred_check
        %p282 = pneg %p56
      $region42: #{forward.3} parent=39 // pred_check_branch
        %284 = sbr.rel (%p282) target = $region44
      $region43: #{forward.3} parent=39 // pred_region
        %p285 = scmp.lt.s32.totalorder %s15, 1
        %s286 = scalar_select %p285, %s15, 1
        %s287 = smul.addr %s286, 4
        %s288 = scalar_lea.vmem %s1, %s287
      $region44: #{forward.3} parent=39 // pred_fallthru
        _
      // Predicated region
      $region45: #{forward.3} parent=39 // pred_check
        %p289 = pneg %p82
      $region46: #{forward.3} parent=39 // pred_check_branch
        %291 = sbr.rel (%p289) target = $region48
      $region47: #{forward.3} parent=39 // pred_region
        %p292 = scmp.lt.s32.totalorder %s15, 1
        %s293 = scalar_select %p292, %s15, 1
        %s294 = smul.addr %s293, 4
        %s295 = scalar_lea.vmem %s2, %s294
      $region48: #{forward.3} parent=39 // pred_fallthru
        _
      // Predicated region
      $region49: #{forward.3} parent=39 // pred_check
        %p296 = pneg %p108
      $region50: #{forward.3} parent=39 // pred_check_branch
        %298 = sbr.rel (%p296) target = $region52
      $region51: #{forward.3} parent=39 // pred_region
        %p299 = scmp.lt.s32.totalorder %s15, 1
        %s300 = scalar_select %p299, %s15, 1
        %s301 = scalar_lea.vmem %s3, %s300
      $region52: #{forward.3} parent=39 // pred_fallthru
        _
    $region40: #{forward.3} parent=5 // pred_fallthru
      _
    %p302 = scmp.le.s32.totalorder 1, %s15
    %p303 = scmp.lt.s32.totalorder %s15, 3
    %p304 = pnand %p302, %p303
    %p305 = pneg %p304
    // Predicated region
    $region53: #{forward.3} parent=5 // pred_check
      _
    $region54: #{forward.3} parent=5 // pred_check_branch
      %307 = sbr.rel (%p304) target = $region56
    $region55: #{forward.3} parent=5 // pred_region
      %s308 = ssub.s32 %s15, 1
      %p309 = pneg %p36
      %p310 = pneg %p33
      %p311 = scmp.lt.s32.totalorder %s20, 1
      %s312 = scalar_select %p311, %s20, 1
      %s313 = smul.addr %s312, 4
      %s314 = scalar_lea.vmem %s1, %s313
      %p315 = pneg %p62
      %p316 = pneg %p59
      %p317 = scmp.lt.s32.totalorder %s20, 1
      %s318 = scalar_select %p317, %s20, 1
      %s319 = smul.addr %s318, 4
      %s320 = scalar_lea.vmem %s2, %s319
      %p321 = pneg %p88
      %p322 = pneg %p85
      %p323 = scmp.lt.s32.totalorder %s20, 1
      %s324 = scalar_select %p323, %s20, 1
      %s325 = scalar_lea.vmem %s3, %s324
      %p326 = pneg %p114
      %p327 = pneg %p111
      %p328 = pneg %p135
      %p329 = pneg %p132
      %p330 = pneg %p156
      %p331 = pneg %p153
      %p332 = pneg %p177
      %p333 = pneg %p174
      %p334 = pneg %p198
      %p335 = pneg %p195
      %p336 = pneg %p219
      %p337 = pneg %p216
      %p338 = pneg %p245
      %p339 = pneg %p242
      %p340 = scmp.lt.s32.totalorder %s20, 1
      %s341 = scalar_select %p340, %s20, 1
      %s342 = scalar_lea.vmem %s9, %s341
      %p343 = scmp.lt.s32.totalorder %s20, 1
      %s344 = scalar_select %p343, %s20, 1
      %s345 = smul.addr %s344, 4
      %s346 = scalar_lea.vmem %s1, %s345
      %p347 = scmp.lt.s32.totalorder %s20, 1
      %s348 = scalar_select %p347, %s20, 1
      %s349 = smul.addr %s348, 4
      %s350 = scalar_lea.vmem %s2, %s349
      %p351 = scmp.lt.s32.totalorder %s20, 1
      %s352 = scalar_select %p351, %s20, 1
      %s353 = scalar_lea.vmem %s3, %s352
      %p354 = scmp.lt.s32.totalorder %s20, 1
      %s355 = scalar_select %p354, %s20, 1
      %s356 = scalar_lea.vmem %s9, %s355
      %v358 = vld [vmem:[%s0] sm:$0x1]
      %v359 = vld [vmem:[%s4] sm:$0xf]
      %v360 = vld [vmem:[%s4 + $0x4] sm:$0xf]
      %v361 = vld [vmem:[%s4 + $0x8] sm:$0xf]
      %v362 = vld [vmem:[%s4 + $0xc] sm:$0xf]
      %v363 = vld [vmem:[%s4 + $0x10] sm:$0xf]
      %v364 = vld [vmem:[%s4 + $0x14] sm:$0xf]
      %v365 = vld [vmem:[%s4 + $0x18] sm:$0xf]
      %v366 = vld [vmem:[%s4 + $0x1c] sm:$0xf]
      %v367 = vld [vmem:[%s4 + $0x20] sm:$0xf]
      %v368 = vld [vmem:[%s4 + $0x24] sm:$0xf]
      %v369 = vld [vmem:[%s4 + $0x28] sm:$0xf]
      %v370 = vld [vmem:[%s4 + $0x2c] sm:$0xf]
      %v371 = vld [vmem:[%s4 + $0x30] sm:$0xf]
      %v372 = vld [vmem:[%s4 + $0x34] sm:$0xf]
      %v373 = vld [vmem:[%s4 + $0x38] sm:$0xf]
      %v374 = vld [vmem:[%s4 + $0x3c] sm:$0xf]
      %v375 = vld [vmem:[%s6] sm:$0xf]
      %v376 = vld [vmem:[%s6 + $0x4] sm:$0xf]
      %v377 = vld [vmem:[%s6 + $0x8] sm:$0xf]
      %v378 = vld [vmem:[%s6 + $0xc] sm:$0xf]
      %v379 = vld [vmem:[%s8] sm:$0x1]
      %v380 = vld [vmem:[%s353] sm:$0x1]
      %v381 = vld [vmem:[%s350] sm:$0xf]
      %v382 = vunpack.c.l.bf16 %v381
      %v384 = vlaneseq
      %v385 = vshrl.u32 %v384, 7
      %v386 = vsub.s32 0, %v385
      %v387 = vrot.slane %v358, %v386
      %388 = vset.pattern.permute.xlu0 2
      %389 = vperm.xlu0 %388, %v387
      %v390 = vpop.permute.xlu0 %389
      %v392 = vsub.f32 %v382, %v390
      %393 = vset.pattern.permute.xlu0 3
      %394 = vperm.xlu0 %393, %v387
      %v395 = vpop.permute.xlu0 %394
      %v397 = vmul.f32 %v392, %v395
      %v398 = vpack.c.bf16 %v397, %v397
      %v399 = vld [vmem:[%s5] sm:$0xf]
      %v400 = vld [vmem:[%s5 + $0x4] sm:$0xf]
      %v401 = vld [vmem:[%s5 + $0x8] sm:$0xf]
      %v402 = vld [vmem:[%s5 + $0xc] sm:$0xf]
      %v403 = vld [vmem:[%s5 + $0x10] sm:$0xf]
      %v404 = vld [vmem:[%s5 + $0x14] sm:$0xf]
      %v405 = vld [vmem:[%s5 + $0x18] sm:$0xf]
      %v406 = vld [vmem:[%s5 + $0x1c] sm:$0xf]
      %v407 = vld [vmem:[%s5 + $0x20] sm:$0xf]
      %v408 = vld [vmem:[%s5 + $0x24] sm:$0xf]
      %v409 = vld [vmem:[%s5 + $0x28] sm:$0xf]
      %v410 = vld [vmem:[%s5 + $0x2c] sm:$0xf]
      %v411 = vld [vmem:[%s5 + $0x30] sm:$0xf]
      %v412 = vld [vmem:[%s5 + $0x34] sm:$0xf]
      %v413 = vld [vmem:[%s5 + $0x38] sm:$0xf]
      %v414 = vld [vmem:[%s5 + $0x3c] sm:$0xf]
      %v431 = vunpack.c.l.b16 %v399
      %v432 = vunpack.c.l.b16 %v400
      %v433 = vunpack.c.l.b16 %v401
      %v434 = vunpack.c.l.b16 %v402
      %v435 = vunpack.c.l.b16 %v403
      %v436 = vunpack.c.l.b16 %v404
      %v437 = vunpack.c.l.b16 %v405
      %v438 = vunpack.c.l.b16 %v406
      %v439 = vunpack.c.l.b16 %v407
      %v440 = vunpack.c.l.b16 %v408
      %v441 = vunpack.c.l.b16 %v409
      %v442 = vunpack.c.l.b16 %v410
      %v443 = vunpack.c.l.b16 %v411
      %v444 = vunpack.c.l.b16 %v412
      %v445 = vunpack.c.l.b16 %v413
      %v446 = vunpack.c.l.b16 %v414
      %v447 = vpack.c.b16 %v432, %v431
      %v448 = vpack.c.b16 %v434, %v433
      %v449 = vpack.c.b16 %v436, %v435
      %v450 = vpack.c.b16 %v438, %v437
      %v451 = vpack.c.b16 %v440, %v439
      %v452 = vpack.c.b16 %v442, %v441
      %v453 = vpack.c.b16 %v444, %v443
      %v454 = vpack.c.b16 %v446, %v445
      %463 = vmatprep.subr.bf16.mxu0 0
      %464 = vmatpush1.bf16.msra.mxu0 %v454
      %465 = vmatprep.subr.bf16.mxu0 0
      %466 = vmatpush1.bf16.msra.mxu0 %v453
      %467 = vmatprep.subr.bf16.mxu0 0
      %468 = vmatpush1.bf16.msra.mxu0 %v452
      %469 = vmatprep.subr.bf16.mxu0 0
      %470 = vmatpush1.bf16.msra.mxu0 %v451
      %471 = vmatprep.subr.bf16.mxu0 0
      %472 = vmatpush1.bf16.msra.mxu0 %v450
      %473 = vmatprep.subr.bf16.mxu0 0
      %474 = vmatpush1.bf16.msra.mxu0 %v449
      %475 = vmatprep.subr.bf16.mxu0 0
      %476 = vmatpush1.bf16.msra.mxu0 %v448
      %477 = vmatprep.subr.bf16.mxu0 0
      %478 = vmatpush1.bf16.msra.mxu0 %v447
      %479 = vmatprep.subr.bf16.mxu0 0
      %480 = vmatpush2.bf16.msra.mxu0 0
      %481 = vmatprep.subr.bf16.mxu0 0
      %482 = vmatpush2.bf16.msra.mxu0 0
      %483 = vmatprep.subr.bf16.mxu0 0
      %484 = vmatpush2.bf16.msra.mxu0 0
      %485 = vmatprep.subr.bf16.mxu0 0
      %486 = vmatpush2.bf16.msra.mxu0 0
      %487 = vmatprep.subr.bf16.mxu0 0
      %488 = vmatpush2.bf16.msra.mxu0 0
      %489 = vmatprep.subr.bf16.mxu0 0
      %490 = vmatpush2.bf16.msra.mxu0 0
      %491 = vmatprep.subr.bf16.mxu0 0
      %492 = vmatpush2.bf16.msra.mxu0 0
      %493 = vmatprep.subr.bf16.mxu0 0
      %494 = vmatpush2.bf16.msra.mxu0 0
      %495 = vmatprep.mubr.bf16.mxu0 0
      %496 = vmatmul.mubr.bf16.gmra.mxu0 %v398
      %v497 = vpop.f32.mrf.mxu0
      %v498 = vadd.f32 0.0, %v497
      %v499 = vpop.f32.mrf.mxu0
      %v500 = vpop.f32.mrf.mxu0
      %v501 = vpop.f32.mrf.mxu0
      %502 = vdwg.mxu0
      %v503 = vmax.f32 %v498, 0.0
      %v504 = vld [vmem:[%s7] sm:$0xff]
      %v505 = vmul.f32 %v503, %v504
      %v506 = vmax.f32 %v505, 0.0
      %v507 = vpack.c.bf16 %v506, %v506
      %v508 = vld [vmem:[%s346] sm:$0xf]
      %v509 = vunpack.c.l.bf16 %v508
      %510 = vset.pattern.permute.xlu0 0
      %511 = vperm.xlu0 %510, %v387
      %v512 = vpop.permute.xlu0 %511
      %v514 = vsub.f32 %v509, %v512
      %515 = vset.pattern.permute.xlu0 1
      %516 = vperm.xlu0 %515, %v387
      %v517 = vpop.permute.xlu0 %516
      %v519 = vmul.f32 %v514, %v517
      %v520 = vpack.c.bf16 %v519, %v519
      %v537 = vunpack.c.l.b16 %v359
      %v538 = vunpack.c.l.b16 %v360
      %v539 = vunpack.c.l.b16 %v361
      %v540 = vunpack.c.l.b16 %v362
      %v541 = vunpack.c.l.b16 %v363
      %v542 = vunpack.c.l.b16 %v364
      %v543 = vunpack.c.l.b16 %v365
      %v544 = vunpack.c.l.b16 %v366
      %v545 = vunpack.c.l.b16 %v367
      %v546 = vunpack.c.l.b16 %v368
      %v547 = vunpack.c.l.b16 %v369
      %v548 = vunpack.c.l.b16 %v370
      %v549 = vunpack.c.l.b16 %v371
      %v550 = vunpack.c.l.b16 %v372
      %v551 = vunpack.c.l.b16 %v373
      %v552 = vunpack.c.l.b16 %v374
      %v553 = vpack.c.b16 %v538, %v537
      %v554 = vpack.c.b16 %v540, %v539
      %v555 = vpack.c.b16 %v542, %v541
      %v556 = vpack.c.b16 %v544, %v543
      %v557 = vpack.c.b16 %v546, %v545
      %v558 = vpack.c.b16 %v548, %v547
      %v559 = vpack.c.b16 %v550, %v549
      %v560 = vpack.c.b16 %v552, %v551
      %569 = vmatprep.subr.bf16.mxu0 0
      %570 = vmatpush1.bf16.msra.mxu0 %v560
      %571 = vmatprep.subr.bf16.mxu0 0
      %572 = vmatpush1.bf16.msra.mxu0 %v559
      %573 = vmatprep.subr.bf16.mxu0 0
      %574 = vmatpush1.bf16.msra.mxu0 %v558
      %575 = vmatprep.subr.bf16.mxu0 0
      %576 = vmatpush1.bf16.msra.mxu0 %v557
      %577 = vmatprep.subr.bf16.mxu0 0
      %578 = vmatpush1.bf16.msra.mxu0 %v556
      %579 = vmatprep.subr.bf16.mxu0 0
      %580 = vmatpush1.bf16.msra.mxu0 %v555
      %581 = vmatprep.subr.bf16.mxu0 0
      %582 = vmatpush1.bf16.msra.mxu0 %v554
      %583 = vmatprep.subr.bf16.mxu0 0
      %584 = vmatpush1.bf16.msra.mxu0 %v553
      %585 = vmatprep.subr.bf16.mxu0 0
      %586 = vmatpush2.bf16.msra.mxu0 0
      %587 = vmatprep.subr.bf16.mxu0 0
      %588 = vmatpush2.bf16.msra.mxu0 0
      %589 = vmatprep.subr.bf16.mxu0 0
      %590 = vmatpush2.bf16.msra.mxu0 0
      %591 = vmatprep.subr.bf16.mxu0 0
      %592 = vmatpush2.bf16.msra.mxu0 0
      %593 = vmatprep.subr.bf16.mxu0 0
      %594 = vmatpush2.bf16.msra.mxu0 0
      %595 = vmatprep.subr.bf16.mxu0 0
      %596 = vmatpush2.bf16.msra.mxu0 0
      %597 = vmatprep.subr.bf16.mxu0 0
      %598 = vmatpush2.bf16.msra.mxu0 0
      %599 = vmatprep.subr.bf16.mxu0 0
      %600 = vmatpush2.bf16.msra.mxu0 0
      %601 = vmatprep.mubr.bf16.mxu0 0
      %602 = vmatmul.mubr.bf16.gmra.mxu0 %v520
      %v603 = vpop.f32.mrf.mxu0
      %v604 = vadd.f32 0.0, %v603
      %v605 = vpop.f32.mrf.mxu0
      %v606 = vpop.f32.mrf.mxu0
      %v607 = vpop.f32.mrf.mxu0
      %608 = vdwg.mxu0
      %v609 = vmax.f32 %v604, 0.0
      %v610 = vpack.c.bf16 %v609, %v609
      %v612 = vlaneseq
      %v613 = vshrl.u32 %v612, 7
      %v614 = vsub.s32 0, %v613
      %v615 = vrot.slane %v380, %v614
      %vm617 = vcmask 261120
      %v619 = vsel %vm617, %v507, 0
      %v622 = vsel %vm617, %v610, 0
      %624 = vmatprep.subr.bf16.mxu0 0
      %625 = vmatpush1.bf16.xpose.msra.mxu0 0
      %626 = vmatprep.subr.bf16.mxu0 0
      %627 = vmatpush1.bf16.xpose.msra.mxu0 0
      %628 = vmatprep.subr.bf16.mxu0 0
      %629 = vmatpush1.bf16.xpose.msra.mxu0 0
      %630 = vmatprep.subr.bf16.mxu0 0
      %631 = vmatpush1.bf16.xpose.msra.mxu0 0
      %632 = vmatprep.subr.bf16.mxu0 0
      %633 = vmatpush1.bf16.xpose.msra.mxu0 0
      %634 = vmatprep.subr.bf16.mxu0 0
      %635 = vmatpush1.bf16.xpose.msra.mxu0 0
      %636 = vmatprep.subr.bf16.mxu0 0
      %637 = vmatpush1.bf16.xpose.msra.mxu0 0
      %638 = vmatprep.subr.bf16.mxu0 0
      %639 = vmatpush1.bf16.xpose.msra.mxu0 %v622
      %640 = vmatprep.subr.bf16.mxu0 0
      %641 = vmatpush2.bf16.xpose.msra.mxu0 0
      %642 = vmatprep.subr.bf16.mxu0 0
      %643 = vmatpush2.bf16.xpose.msra.mxu0 0
      %644 = vmatprep.subr.bf16.mxu0 0
      %645 = vmatpush2.bf16.xpose.msra.mxu0 0
      %646 = vmatprep.subr.bf16.mxu0 0
      %647 = vmatpush2.bf16.xpose.msra.mxu0 0
      %648 = vmatprep.subr.bf16.mxu0 0
      %649 = vmatpush2.bf16.xpose.msra.mxu0 0
      %650 = vmatprep.subr.bf16.mxu0 0
      %651 = vmatpush2.bf16.xpose.msra.mxu0 0
      %652 = vmatprep.subr.bf16.mxu0 0
      %653 = vmatpush2.bf16.xpose.msra.mxu0 0
      %654 = vmatprep.subr.bf16.mxu0 0
      %655 = vmatpush2.bf16.xpose.msra.mxu0 0
      %656 = vmatprep.mubr.bf16.mxu0 0
      %657 = vmatmul.mubr.bf16.gmra.mxu0 %v619
      %v658 = vpop.f32.mrf.mxu0
      %v659 = vadd.f32 %v615, %v658
      %v660 = vpop.f32.mrf.mxu0
      %v661 = vpop.f32.mrf.mxu0
      %v662 = vpop.f32.mrf.mxu0
      %663 = vdwg.mxu0
      %vm664 = vcmask 64512
      %v665 = vsel %vm664, %v659, -inf
      %666 = vmax.xlane.f32.xlu0 %v665
      %v667 = vpop.xlane.xlu0 %666
      %v668 = vsub.f32 %v659, %v667
      %v669 = vmul.f32 %v668, 1.442695
      %v670 = vpow.pop %v669
      %v671 = vsel %vm664, %v670, 0.0
      %672 = vadd.xlane.f32.xlu0 %v671
      %v673 = vpop.xlane.xlu0 %672
      %v674 = vrcp.pop %v673
      %v675 = vmul.f32 %v670, %v674
      %v676 = vpack.c.bf16 %v675, %v675
      %677 = vxpose.xlu0.c.b16.start [1/8] %v676, 128
      %678 = vxpose.xlu0.c.b16.cont [2/8] 0, 128
      %679 = vxpose.xlu0.c.b16.cont [3/8] 0, 128
      %680 = vxpose.xlu0.c.b16.cont [4/8] 0, 128
      %681 = vxpose.xlu0.c.b16.cont [5/8] 0, 128
      %682 = vxpose.xlu0.c.b16.cont [6/8] 0, 128
      %683 = vxpose.xlu0.c.b16.cont [7/8] 0, 128
      %684 = vxpose.xlu0.c.b16.end [8/8] 0, 128
      %v685 = vpop.trf.xlu0
      %v686 = vpop.trf.xlu0
      %v687 = vpop.trf.xlu0
      %v688 = vpop.trf.xlu0
      %v689 = vpop.trf.xlu0
      %v690 = vpop.trf.xlu0
      %v691 = vpop.trf.xlu0
      %v692 = vpop.trf.xlu0
      %v694 = vsel %vm664, %v685, 0
      %vm696 = vcmask 1043456
      %v697 = vsel %vm696, %v507, 0
      %699 = vmatprep.subr.bf16.mxu0 0
      %700 = vmatpush1.bf16.msra.mxu0 0
      %701 = vmatprep.subr.bf16.mxu0 0
      %702 = vmatpush1.bf16.msra.mxu0 0
      %703 = vmatprep.subr.bf16.mxu0 0
      %704 = vmatpush1.bf16.msra.mxu0 0
      %705 = vmatprep.subr.bf16.mxu0 0
      %706 = vmatpush1.bf16.msra.mxu0 0
      %707 = vmatprep.subr.bf16.mxu0 0
      %708 = vmatpush1.bf16.msra.mxu0 0
      %709 = vmatprep.subr.bf16.mxu0 0
      %710 = vmatpush1.bf16.msra.mxu0 0
      %711 = vmatprep.subr.bf16.mxu0 0
      %712 = vmatpush1.bf16.msra.mxu0 0
      %713 = vmatprep.subr.bf16.mxu0 0
      %714 = vmatpush1.bf16.msra.mxu0 %v697
      %715 = vmatprep.subr.bf16.mxu0 0
      %716 = vmatpush2.bf16.msra.mxu0 0
      %717 = vmatprep.subr.bf16.mxu0 0
      %718 = vmatpush2.bf16.msra.mxu0 0
      %719 = vmatprep.subr.bf16.mxu0 0
      %720 = vmatpush2.bf16.msra.mxu0 0
      %721 = vmatprep.subr.bf16.mxu0 0
      %722 = vmatpush2.bf16.msra.mxu0 0
      %723 = vmatprep.subr.bf16.mxu0 0
      %724 = vmatpush2.bf16.msra.mxu0 0
      %725 = vmatprep.subr.bf16.mxu0 0
      %726 = vmatpush2.bf16.msra.mxu0 0
      %727 = vmatprep.subr.bf16.mxu0 0
      %728 = vmatpush2.bf16.msra.mxu0 0
      %729 = vmatprep.subr.bf16.mxu0 0
      %730 = vmatpush2.bf16.msra.mxu0 0
      %731 = vmatprep.mubr.bf16.mxu0 0
      %732 = vmatmul.mubr.bf16.gmra.mxu0 %v694
      %v733 = vpop.f32.mrf.mxu0
      %v734 = vadd.f32 0.0, %v733
      %v735 = vpop.f32.mrf.mxu0
      %v736 = vpop.f32.mrf.mxu0
      %v737 = vpop.f32.mrf.mxu0
      %738 = vdwg.mxu0
      %v739 = vmax.f32 %v734, 0.0
      %v740 = vpack.c.bf16 %v739, %v739
      %v745 = vunpack.c.l.b16 %v375
      %v746 = vunpack.c.l.b16 %v376
      %v747 = vunpack.c.l.b16 %v377
      %v748 = vunpack.c.l.b16 %v378
      %v749 = vpack.c.b16 %v746, %v745
      %v750 = vpack.c.b16 %v748, %v747
      %v754 = vsel %vm617, %v740, 0
      %756 = vmatprep.subr.bf16.mxu0 0
      %757 = vmatpush1.bf16.msra.mxu0 0
      %758 = vmatprep.subr.bf16.mxu0 0
      %759 = vmatpush1.bf16.msra.mxu0 0
      %760 = vmatprep.subr.bf16.mxu0 0
      %761 = vmatpush1.bf16.msra.mxu0 0
      %762 = vmatprep.subr.bf16.mxu0 0
      %763 = vmatpush1.bf16.msra.mxu0 0
      %764 = vmatprep.subr.bf16.mxu0 0
      %765 = vmatpush1.bf16.msra.mxu0 0
      %766 = vmatprep.subr.bf16.mxu0 0
      %767 = vmatpush1.bf16.msra.mxu0 0
      %768 = vmatprep.subr.bf16.mxu0 0
      %769 = vmatpush1.bf16.msra.mxu0 %v750
      %770 = vmatprep.subr.bf16.mxu0 0
      %771 = vmatpush1.bf16.msra.mxu0 %v749
      %772 = vmatprep.subr.bf16.mxu0 0
      %773 = vmatpush2.bf16.msra.mxu0 0
      %774 = vmatprep.subr.bf16.mxu0 0
      %775 = vmatpush2.bf16.msra.mxu0 0
      %776 = vmatprep.subr.bf16.mxu0 0
      %777 = vmatpush2.bf16.msra.mxu0 0
      %778 = vmatprep.subr.bf16.mxu0 0
      %779 = vmatpush2.bf16.msra.mxu0 0
      %780 = vmatprep.subr.bf16.mxu0 0
      %781 = vmatpush2.bf16.msra.mxu0 0
      %782 = vmatprep.subr.bf16.mxu0 0
      %783 = vmatpush2.bf16.msra.mxu0 0
      %784 = vmatprep.subr.bf16.mxu0 0
      %785 = vmatpush2.bf16.msra.mxu0 0
      %786 = vmatprep.subr.bf16.mxu0 0
      %787 = vmatpush2.bf16.msra.mxu0 0
      %788 = vmatprep.mubr.bf16.mxu0 0
      %789 = vmatmul.mubr.bf16.gmra.mxu0 %v754
      %v790 = vpop.f32.mrf.mxu0
      %v791 = vadd.f32 0.0, %v790
      %v792 = vpop.f32.mrf.mxu0
      %v793 = vpop.f32.mrf.mxu0
      %v794 = vpop.f32.mrf.mxu0
      %795 = vdwg.mxu0
      %v797 = vlaneseq
      %v798 = vshrl.u32 %v797, 7
      %v799 = vsub.s32 0, %v798
      %v800 = vrot.slane %v379, %v799
      %v802 = vmul.f32 %v739, %v800
      %v803 = vsel %vm617, %v802, 0.0
      %804 = vadd.xlane.f32.xlu0 %v803
      %v805 = vpop.xlane.xlu0 %804
      %v806 = vadd.f32 %v604, %v805
      %807 = vrot.lane.b32.xlu0 %v387, 28
      %v808 = vpop.permute.xlu0 %807
      %v810 = vadd.f32 %v806, %v808
      %v811 = vsub.f32 0.0, %v810
      %v812 = vmul.f32 %v811, 1.442695
      %v813 = vpow.pop %v812
      %v814 = vadd.f32 %v813, 1.0
      %v815 = vrcp.pop %v814
      %v816 = vmul.f32 1.0, %v815
      %v817 = vsub.f32 %v791, %v519
      %819 = vset.pattern.permute.xlu0 32
      %820 = vperm.xlu0 %819, %v816
      %v821 = vpop.permute.xlu0 %820
      %v823 = vmul.f32 %v821, %v817
      %v824 = vadd.f32 %v519, %v823
      %v825 = vpack.c.bf16 %v824, %v824
      %826 = vmatprep.subr.bf16.mxu0 0
      %827 = vmatpush1.bf16.msra.mxu0 %v560
      %828 = vmatprep.subr.bf16.mxu0 0
      %829 = vmatpush1.bf16.msra.mxu0 %v559
      %830 = vmatprep.subr.bf16.mxu0 0
      %831 = vmatpush1.bf16.msra.mxu0 %v558
      %832 = vmatprep.subr.bf16.mxu0 0
      %833 = vmatpush1.bf16.msra.mxu0 %v557
      %834 = vmatprep.subr.bf16.mxu0 0
      %835 = vmatpush1.bf16.msra.mxu0 %v556
      %836 = vmatprep.subr.bf16.mxu0 0
      %837 = vmatpush1.bf16.msra.mxu0 %v555
      %838 = vmatprep.subr.bf16.mxu0 0
      %839 = vmatpush1.bf16.msra.mxu0 %v554
      %840 = vmatprep.subr.bf16.mxu0 0
      %841 = vmatpush1.bf16.msra.mxu0 %v553
      %842 = vmatprep.subr.bf16.mxu0 0
      %843 = vmatpush2.bf16.msra.mxu0 0
      %844 = vmatprep.subr.bf16.mxu0 0
      %845 = vmatpush2.bf16.msra.mxu0 0
      %846 = vmatprep.subr.bf16.mxu0 0
      %847 = vmatpush2.bf16.msra.mxu0 0
      %848 = vmatprep.subr.bf16.mxu0 0
      %849 = vmatpush2.bf16.msra.mxu0 0
      %850 = vmatprep.subr.bf16.mxu0 0
      %851 = vmatpush2.bf16.msra.mxu0 0
      %852 = vmatprep.subr.bf16.mxu0 0
      %853 = vmatpush2.bf16.msra.mxu0 0
      %854 = vmatprep.subr.bf16.mxu0 0
      %855 = vmatpush2.bf16.msra.mxu0 0
      %856 = vmatprep.subr.bf16.mxu0 0
      %857 = vmatpush2.bf16.msra.mxu0 0
      %858 = vmatprep.mubr.bf16.mxu0 0
      %859 = vmatmul.mubr.bf16.gmra.mxu0 %v825
      %v860 = vpop.f32.mrf.mxu0
      %v861 = vadd.f32 0.0, %v860
      %v862 = vpop.f32.mrf.mxu0
      %v863 = vpop.f32.mrf.mxu0
      %v864 = vpop.f32.mrf.mxu0
      %865 = vdwg.mxu0
      %v866 = vmax.f32 %v861, 0.0
      %v867 = vpack.c.bf16 %v866, %v866
      %v869 = vsel %vm617, %v867, 0
      %871 = vmatprep.subr.bf16.mxu0 0
      %872 = vmatpush1.bf16.xpose.msra.mxu0 0
      %873 = vmatprep.subr.bf16.mxu0 0
      %874 = vmatpush1.bf16.xpose.msra.mxu0 0
      %875 = vmatprep.subr.bf16.mxu0 0
      %876 = vmatpush1.bf16.xpose.msra.mxu0 0
      %877 = vmatprep.subr.bf16.mxu0 0
      %878 = vmatpush1.bf16.xpose.msra.mxu0 0
      %879 = vmatprep.subr.bf16.mxu0 0
      %880 = vmatpush1.bf16.xpose.msra.mxu0 0
      %881 = vmatprep.subr.bf16.mxu0 0
      %882 = vmatpush1.bf16.xpose.msra.mxu0 0
      %883 = vmatprep.subr.bf16.mxu0 0
      %884 = vmatpush1.bf16.xpose.msra.mxu0 0
      %885 = vmatprep.subr.bf16.mxu0 0
      %886 = vmatpush1.bf16.xpose.msra.mxu0 %v869
      %887 = vmatprep.subr.bf16.mxu0 0
      %888 = vmatpush2.bf16.xpose.msra.mxu0 0
      %889 = vmatprep.subr.bf16.mxu0 0
      %890 = vmatpush2.bf16.xpose.msra.mxu0 0
      %891 = vmatprep.subr.bf16.mxu0 0
      %892 = vmatpush2.bf16.xpose.msra.mxu0 0
      %893 = vmatprep.subr.bf16.mxu0 0
      %894 = vmatpush2.bf16.xpose.msra.mxu0 0
      %895 = vmatprep.subr.bf16.mxu0 0
      %896 = vmatpush2.bf16.xpose.msra.mxu0 0
      %897 = vmatprep.subr.bf16.mxu0 0
      %898 = vmatpush2.bf16.xpose.msra.mxu0 0
      %899 = vmatprep.subr.bf16.mxu0 0
      %900 = vmatpush2.bf16.xpose.msra.mxu0 0
      %901 = vmatprep.subr.bf16.mxu0 0
      %902 = vmatpush2.bf16.xpose.msra.mxu0 0
      %903 = vmatprep.mubr.bf16.mxu0 0
      %904 = vmatmul.mubr.bf16.gmra.mxu0 %v619
      %v905 = vpop.f32.mrf.mxu0
      %v906 = vadd.f32 %v615, %v905
      %v907 = vpop.f32.mrf.mxu0
      %v908 = vpop.f32.mrf.mxu0
      %v909 = vpop.f32.mrf.mxu0
      %910 = vdwg.mxu0
      %v911 = vsel %vm664, %v906, -inf
      %912 = vmax.xlane.f32.xlu0 %v911
      %v913 = vpop.xlane.xlu0 %912
      %v914 = vsub.f32 %v906, %v913
      %v915 = vmul.f32 %v914, 1.442695
      %v916 = vpow.pop %v915
      %v917 = vsel %vm664, %v916, 0.0
      %918 = vadd.xlane.f32.xlu0 %v917
      %v919 = vpop.xlane.xlu0 %918
      %v920 = vrcp.pop %v919
      %v921 = vmul.f32 %v916, %v920
      %v922 = vpack.c.bf16 %v921, %v921
      %923 = vxpose.xlu0.c.b16.start [1/8] %v922, 128
      %924 = vxpose.xlu0.c.b16.cont [2/8] 0, 128
      %925 = vxpose.xlu0.c.b16.cont [3/8] 0, 128
      %926 = vxpose.xlu0.c.b16.cont [4/8] 0, 128
      %927 = vxpose.xlu0.c.b16.cont [5/8] 0, 128
      %928 = vxpose.xlu0.c.b16.cont [6/8] 0, 128
      %929 = vxpose.xlu0.c.b16.cont [7/8] 0, 128
      %930 = vxpose.xlu0.c.b16.end [8/8] 0, 128
      %v931 = vpop.trf.xlu0
      %v932 = vpop.trf.xlu0
      %v933 = vpop.trf.xlu0
      %v934 = vpop.trf.xlu0
      %v935 = vpop.trf.xlu0
      %v936 = vpop.trf.xlu0
      %v937 = vpop.trf.xlu0
      %v938 = vpop.trf.xlu0
      %v940 = vsel %vm664, %v931, 0
      %942 = vmatprep.subr.bf16.mxu0 0
      %943 = vmatpush1.bf16.msra.mxu0 0
      %944 = vmatprep.subr.bf16.mxu0 0
      %945 = vmatpush1.bf16.msra.mxu0 0
      %946 = vmatprep.subr.bf16.mxu0 0
      %947 = vmatpush1.bf16.msra.mxu0 0
      %948 = vmatprep.subr.bf16.mxu0 0
      %949 = vmatpush1.bf16.msra.mxu0 0
      %950 = vmatprep.subr.bf16.mxu0 0
      %951 = vmatpush1.bf16.msra.mxu0 0
      %952 = vmatprep.subr.bf16.mxu0 0
      %953 = vmatpush1.bf16.msra.mxu0 0
      %954 = vmatprep.subr.bf16.mxu0 0
      %955 = vmatpush1.bf16.msra.mxu0 0
      %956 = vmatprep.subr.bf16.mxu0 0
      %957 = vmatpush1.bf16.msra.mxu0 %v697
      %958 = vmatprep.subr.bf16.mxu0 0
      %959 = vmatpush2.bf16.msra.mxu0 0
      %960 = vmatprep.subr.bf16.mxu0 0
      %961 = vmatpush2.bf16.msra.mxu0 0
      %962 = vmatprep.subr.bf16.mxu0 0
      %963 = vmatpush2.bf16.msra.mxu0 0
      %964 = vmatprep.subr.bf16.mxu0 0
      %965 = vmatpush2.bf16.msra.mxu0 0
      %966 = vmatprep.subr.bf16.mxu0 0
      %967 = vmatpush2.bf16.msra.mxu0 0
      %968 = vmatprep.subr.bf16.mxu0 0
      %969 = vmatpush2.bf16.msra.mxu0 0
      %970 = vmatprep.subr.bf16.mxu0 0
      %971 = vmatpush2.bf16.msra.mxu0 0
      %972 = vmatprep.subr.bf16.mxu0 0
      %973 = vmatpush2.bf16.msra.mxu0 0
      %974 = vmatprep.mubr.bf16.mxu0 0
      %975 = vmatmul.mubr.bf16.gmra.mxu0 %v940
      %v976 = vpop.f32.mrf.mxu0
      %v977 = vadd.f32 0.0, %v976
      %v978 = vpop.f32.mrf.mxu0
      %v979 = vpop.f32.mrf.mxu0
      %v980 = vpop.f32.mrf.mxu0
      %981 = vdwg.mxu0
      %v982 = vmax.f32 %v977, 0.0
      %v983 = vpack.c.bf16 %v982, %v982
      %v985 = vsel %vm617, %v983, 0
      %987 = vmatprep.subr.bf16.mxu0 0
      %988 = vmatpush1.bf16.msra.mxu0 0
      %989 = vmatprep.subr.bf16.mxu0 0
      %990 = vmatpush1.bf16.msra.mxu0 0
      %991 = vmatprep.subr.bf16.mxu0 0
      %992 = vmatpush1.bf16.msra.mxu0 0
      %993 = vmatprep.subr.bf16.mxu0 0
      %994 = vmatpush1.bf16.msra.mxu0 0
      %995 = vmatprep.subr.bf16.mxu0 0
      %996 = vmatpush1.bf16.msra.mxu0 0
      %997 = vmatprep.subr.bf16.mxu0 0
      %998 = vmatpush1.bf16.msra.mxu0 0
      %999 = vmatprep.subr.bf16.mxu0 0
      %1000 = vmatpush1.bf16.msra.mxu0 %v750
      %1001 = vmatprep.subr.bf16.mxu0 0
      %1002 = vmatpush1.bf16.msra.mxu0 %v749
      %1003 = vmatprep.subr.bf16.mxu0 0
      %1004 = vmatpush2.bf16.msra.mxu0 0
      %1005 = vmatprep.subr.bf16.mxu0 0
      %1006 = vmatpush2.bf16.msra.mxu0 0
      %1007 = vmatprep.subr.bf16.mxu0 0
      %1008 = vmatpush2.bf16.msra.mxu0 0
      %1009 = vmatprep.subr.bf16.mxu0 0
      %1010 = vmatpush2.bf16.msra.mxu0 0
      %1011 = vmatprep.subr.bf16.mxu0 0
      %1012 = vmatpush2.bf16.msra.mxu0 0
      %1013 = vmatprep.subr.bf16.mxu0 0
      %1014 = vmatpush2.bf16.msra.mxu0 0
      %1015 = vmatprep.subr.bf16.mxu0 0
      %1016 = vmatpush2.bf16.msra.mxu0 0
      %1017 = vmatprep.subr.bf16.mxu0 0
      %1018 = vmatpush2.bf16.msra.mxu0 0
      %1019 = vmatprep.mubr.bf16.mxu0 0
      %1020 = vmatmul.mubr.bf16.gmra.mxu0 %v985
      %v1021 = vpop.f32.mrf.mxu0
      %v1022 = vadd.f32 0.0, %v1021
      %v1023 = vpop.f32.mrf.mxu0
      %v1024 = vpop.f32.mrf.mxu0
      %v1025 = vpop.f32.mrf.mxu0
      %1026 = vdwg.mxu0
      %v1027 = vmul.f32 %v982, %v800
      %v1028 = vsel %vm617, %v1027, 0.0
      %1029 = vadd.xlane.f32.xlu0 %v1028
      %v1030 = vpop.xlane.xlu0 %1029
      %v1031 = vadd.f32 %v861, %v1030
      %v1032 = vadd.f32 %v1031, %v808
      %v1033 = vsub.f32 0.0, %v1032
      %v1034 = vmul.f32 %v1033, 1.442695
      %v1035 = vpow.pop %v1034
      %v1036 = vadd.f32 %v1035, 1.0
      %v1037 = vrcp.pop %v1036
      %v1038 = vmul.f32 1.0, %v1037
      %v1039 = vsub.f32 %v1022, %v824
      %1041 = vset.pattern.permute.xlu0 32
      %1042 = vperm.xlu0 %1041, %v1038
      %v1043 = vpop.permute.xlu0 %1042
      %v1045 = vmul.f32 %v1043, %v1039
      %v1046 = vadd.f32 %v824, %v1045
      %v1047 = vpack.c.bf16 %v1046, %v1046
      %1048 = vmatprep.subr.bf16.mxu0 0
      %1049 = vmatpush1.bf16.msra.mxu0 %v560
      %1050 = vmatprep.subr.bf16.mxu0 0
      %1051 = vmatpush1.bf16.msra.mxu0 %v559
      %1052 = vmatprep.subr.bf16.mxu0 0
      %1053 = vmatpush1.bf16.msra.mxu0 %v558
      %1054 = vmatprep.subr.bf16.mxu0 0
      %1055 = vmatpush1.bf16.msra.mxu0 %v557
      %1056 = vmatprep.subr.bf16.mxu0 0
      %1057 = vmatpush1.bf16.msra.mxu0 %v556
      %1058 = vmatprep.subr.bf16.mxu0 0
      %1059 = vmatpush1.bf16.msra.mxu0 %v555
      %1060 = vmatprep.subr.bf16.mxu0 0
      %1061 = vmatpush1.bf16.msra.mxu0 %v554
      %1062 = vmatprep.subr.bf16.mxu0 0
      %1063 = vmatpush1.bf16.msra.mxu0 %v553
      %1064 = vmatprep.subr.bf16.mxu0 0
      %1065 = vmatpush2.bf16.msra.mxu0 0
      %1066 = vmatprep.subr.bf16.mxu0 0
      %1067 = vmatpush2.bf16.msra.mxu0 0
      %1068 = vmatprep.subr.bf16.mxu0 0
      %1069 = vmatpush2.bf16.msra.mxu0 0
      %1070 = vmatprep.subr.bf16.mxu0 0
      %1071 = vmatpush2.bf16.msra.mxu0 0
      %1072 = vmatprep.subr.bf16.mxu0 0
      %1073 = vmatpush2.bf16.msra.mxu0 0
      %1074 = vmatprep.subr.bf16.mxu0 0
      %1075 = vmatpush2.bf16.msra.mxu0 0
      %1076 = vmatprep.subr.bf16.mxu0 0
      %1077 = vmatpush2.bf16.msra.mxu0 0
      %1078 = vmatprep.subr.bf16.mxu0 0
      %1079 = vmatpush2.bf16.msra.mxu0 0
      %1080 = vmatprep.mubr.bf16.mxu0 0
      %1081 = vmatmul.mubr.bf16.gmra.mxu0 %v1047
      %v1082 = vpop.f32.mrf.mxu0
      %v1083 = vadd.f32 0.0, %v1082
      %v1084 = vpop.f32.mrf.mxu0
      %v1085 = vpop.f32.mrf.mxu0
      %v1086 = vpop.f32.mrf.mxu0
      %1087 = vdwg.mxu0
      %v1088 = vmax.f32 %v1083, 0.0
      %v1089 = vpack.c.bf16 %v1088, %v1088
      %v1091 = vsel %vm617, %v1089, 0
      %1093 = vmatprep.subr.bf16.mxu0 0
      %1094 = vmatpush1.bf16.xpose.msra.mxu0 0
      %1095 = vmatprep.subr.bf16.mxu0 0
      %1096 = vmatpush1.bf16.xpose.msra.mxu0 0
      %1097 = vmatprep.subr.bf16.mxu0 0
      %1098 = vmatpush1.bf16.xpose.msra.mxu0 0
      %1099 = vmatprep.subr.bf16.mxu0 0
      %1100 = vmatpush1.bf16.xpose.msra.mxu0 0
      %1101 = vmatprep.subr.bf16.mxu0 0
      %1102 = vmatpush1.bf16.xpose.msra.mxu0 0
      %1103 = vmatprep.subr.bf16.mxu0 0
      %1104 = vmatpush1.bf16.xpose.msra.mxu0 0
      %1105 = vmatprep.subr.bf16.mxu0 0
      %1106 = vmatpush1.bf16.xpose.msra.mxu0 0
      %1107 = vmatprep.subr.bf16.mxu0 0
      %1108 = vmatpush1.bf16.xpose.msra.mxu0 %v1091
      %1109 = vmatprep.subr.bf16.mxu0 0
      %1110 = vmatpush2.bf16.xpose.msra.mxu0 0
      %1111 = vmatprep.subr.bf16.mxu0 0
      %1112 = vmatpush2.bf16.xpose.msra.mxu0 0
      %1113 = vmatprep.subr.bf16.mxu0 0
      %1114 = vmatpush2.bf16.xpose.msra.mxu0 0
      %1115 = vmatprep.subr.bf16.mxu0 0
      %1116 = vmatpush2.bf16.xpose.msra.mxu0 0
      %1117 = vmatprep.subr.bf16.mxu0 0
      %1118 = vmatpush2.bf16.xpose.msra.mxu0 0
      %1119 = vmatprep.subr.bf16.mxu0 0
      %1120 = vmatpush2.bf16.xpose.msra.mxu0 0
      %1121 = vmatprep.subr.bf16.mxu0 0
      %1122 = vmatpush2.bf16.xpose.msra.mxu0 0
      %1123 = vmatprep.subr.bf16.mxu0 0
      %1124 = vmatpush2.bf16.xpose.msra.mxu0 0
      %1125 = vmatprep.mubr.bf16.mxu0 0
      %1126 = vmatmul.mubr.bf16.gmra.mxu0 %v619
      %v1127 = vpop.f32.mrf.mxu0
      %v1128 = vadd.f32 0.0, %v1127
      %v1129 = vpop.f32.mrf.mxu0
      %v1130 = vpop.f32.mrf.mxu0
      %v1131 = vpop.f32.mrf.mxu0
      %1132 = vdwg.mxu0
      %v1133 = vpack.c.bf16 %v1128, %v1128
      %1134 = vxpose.xlu0.c.b16.start [1/8] %v1133, 128
      %1135 = vxpose.xlu0.c.b16.cont [2/8] 0, 128
      %1136 = vxpose.xlu0.c.b16.cont [3/8] 0, 128
      %1137 = vxpose.xlu0.c.b16.cont [4/8] 0, 128
      %1138 = vxpose.xlu0.c.b16.cont [5/8] 0, 128
      %1139 = vxpose.xlu0.c.b16.cont [6/8] 0, 128
      %1140 = vxpose.xlu0.c.b16.cont [7/8] 0, 128
      %1141 = vxpose.xlu0.c.b16.end [8/8] 0, 128
      %v1142 = vpop.trf.xlu0
      %v1143 = vpop.trf.xlu0
      %v1144 = vpop.trf.xlu0
      %v1145 = vpop.trf.xlu0
      %v1146 = vpop.trf.xlu0
      %v1147 = vpop.trf.xlu0
      %v1148 = vpop.trf.xlu0
      %v1149 = vpop.trf.xlu0
      %v1151 = vsel %vm664, %v1142, 0
      %1153 = vmatprep.subr.bf16.mxu0 0
      %1154 = vmatpush1.bf16.msra.mxu0 0
      %1155 = vmatprep.subr.bf16.mxu0 0
      %1156 = vmatpush1.bf16.msra.mxu0 0
      %1157 = vmatprep.subr.bf16.mxu0 0
      %1158 = vmatpush1.bf16.msra.mxu0 0
      %1159 = vmatprep.subr.bf16.mxu0 0
      %1160 = vmatpush1.bf16.msra.mxu0 0
      %1161 = vmatprep.subr.bf16.mxu0 0
      %1162 = vmatpush1.bf16.msra.mxu0 0
      %1163 = vmatprep.subr.bf16.mxu0 0
      %1164 = vmatpush1.bf16.msra.mxu0 0
      %1165 = vmatprep.subr.bf16.mxu0 0
      %1166 = vmatpush1.bf16.msra.mxu0 0
      %1167 = vmatprep.subr.bf16.mxu0 0
      %1168 = vmatpush1.bf16.msra.mxu0 %v697
      %1169 = vmatprep.subr.bf16.mxu0 0
      %1170 = vmatpush2.bf16.msra.mxu0 0
      %1171 = vmatprep.subr.bf16.mxu0 0
      %1172 = vmatpush2.bf16.msra.mxu0 0
      %1173 = vmatprep.subr.bf16.mxu0 0
      %1174 = vmatpush2.bf16.msra.mxu0 0
      %1175 = vmatprep.subr.bf16.mxu0 0
      %1176 = vmatpush2.bf16.msra.mxu0 0
      %1177 = vmatprep.subr.bf16.mxu0 0
      %1178 = vmatpush2.bf16.msra.mxu0 0
      %1179 = vmatprep.subr.bf16.mxu0 0
      %1180 = vmatpush2.bf16.msra.mxu0 0
      %1181 = vmatprep.subr.bf16.mxu0 0
      %1182 = vmatpush2.bf16.msra.mxu0 0
      %1183 = vmatprep.subr.bf16.mxu0 0
      %1184 = vmatpush2.bf16.msra.mxu0 0
      %1185 = vmatprep.mubr.bf16.mxu0 0
      %1186 = vmatmul.mubr.bf16.gmra.mxu0 %v1151
      %v1187 = vpop.f32.mrf.mxu0
      %v1188 = vadd.f32 0.0, %v1187
      %v1189 = vpop.f32.mrf.mxu0
      %v1190 = vpop.f32.mrf.mxu0
      %v1191 = vpop.f32.mrf.mxu0
      %1192 = vdwg.mxu0
      %v1193 = vmul.f32 %v1088, %v1188
      %v1194 = vsel %vm617, %v1193, 0.0
      %1195 = vadd.xlane.f32.xlu0 %v1194
      %v1196 = vpop.xlane.xlu0 %1195
      %v1197 = vsub.f32 0.0, %v1196
      %v1198 = vmul.f32 %v1197, 1.442695
      %v1199 = vpow.pop %v1198
      %v1200 = vadd.f32 %v1199, 1.0
      %v1201 = vrcp.pop %v1200
      %v1202 = vmul.f32 1.0, %v1201
      %v1204 = vlaneseq
      %v1205 = vand.u32 %v1204, 127
      %v1206 = vlaneseq
      %v1207 = vshrl.u32 %v1206, 7
      %v1208 = vsub.s32 %v1205, %v1207
      %v1209 = vrot.slane %v1202, %v1208
      %v1211 = vsel %vm664, %v1209, 0.0
      %1212 = vst [vmem:[%s356] sm:$0x1] %v1211
      %p1213 = scmp.lt.s32.totalorder %s20, 1
      %s1214 = scalar_select %p1213, %s20, 1
      %s1215 = scalar_lea.vmem %s9, %s1214
      // Predicated region
      $region57: #{forward.3} parent=55 // pred_check
        %p1216 = pneg %p242
      $region58: #{forward.3} parent=55 // pred_check_branch
        %1218 = sbr.rel (%p1216) target = $region60
      $region59: #{forward.3} parent=55 // pred_region
        _
      $region60: #{forward.3} parent=55 // pred_fallthru
        _
    $region56: #{forward.3} parent=5 // pred_fallthru
      _
    %p1219 = scmp.le.s32.totalorder 2, %s15
    // Predicated region
    $region61: #{forward.3} parent=5 // pred_check
      %p1220 = pneg %p1219
    $region62: #{forward.3} parent=5 // pred_check_branch
      %1222 = sbr.rel (%p1220) target = $region64
    $region63: #{forward.3} parent=5 // pred_region
      %s1223 = ssub.s32 %s15, 2
      // Predicated region
      $region65: #{forward.3} parent=63 // pred_check
        %p1224 = pneg %p248
      $region66: #{forward.3} parent=63 // pred_check_branch
        %1226 = sbr.rel (%p1224) target = $region68
      $region67: #{forward.3} parent=63 // pred_region
        %p1227 = scmp.lt.s32.totalorder %s21, 1
        %s1228 = scalar_select %p1227, %s21, 1
        %s1229 = scalar_lea.vmem %s9, %s1228
      $region68: #{forward.3} parent=63 // pred_fallthru
        _
    $region64: #{forward.3} parent=5 // pred_fallthru
      _
  $region6: #{forward.3} parent=0 // loop_footer
    %s19 = sadd.s32 1, %s15
  $region7: #{forward.3} parent=0 // loop_footer_branch
    %14 = sbr.rel target = $region3
  $region8: #{forward.3} parent=0 // loop_exit
    _

</llo_original>
